<compile_context>
chip_gen: v7x
topology: tpu7x:2x2x1
jax: 0.10.0
libtpu: 0.0.40
codegen_flags: <defaults>
</compile_context>

<pallas_src>
import functools

import jax
import jax.numpy as jnp
from jax.experimental import pallas as pl
from jax.experimental.pallas import tpu as pltpu

HIDDEN_SIZE = 128
INPUT_SIZE = 3600
NUM_CLASSES = 20

LANE = 128
SUBLANE = 8
K_PAD = ((INPUT_SIZE + LANE - 1) // LANE) * LANE      # 3712
N_PAD = ((NUM_CLASSES + LANE - 1) // LANE) * LANE     # 128
MAX_TB = 256                                          # fills the 256x256 MXU M dim


def _round_up(x, m):
    return ((x + m - 1) // m) * m


def mlp_kernel(x_ref, w1_ref, b1_ref, w2_ref, b2_ref, o_ref):
    # fc1: (TB, K_PAD) bf16 @ (K_PAD, H) bf16 -> f32 accumulate on the MXU
    h = jnp.dot(x_ref[...], w1_ref[...], preferred_element_type=jnp.float32)
    # bias + ReLU in f32 on the VPU (v5e VPU has no bf16)
    h = jnp.maximum(h + b1_ref[...], 0.0)
    # fc2: (TB, H) @ (H, N_PAD) -> f32 accumulate
    out = jnp.dot(h.astype(jnp.bfloat16), w2_ref[...],
                  preferred_element_type=jnp.float32)
    o_ref[...] = out + b2_ref[...]


@functools.partial(jax.jit, static_argnames=())
def mlp_forward(x, w1, b1, w2, b2):
    B = x.shape[0]

    # ---- pad + cast inputs (layout plumbing on the host/XLA side) ----------
    x_p = jnp.zeros((B, K_PAD), jnp.bfloat16).at[:, :INPUT_SIZE].set(
        x.astype(jnp.bfloat16))
    w1_p = jnp.zeros((K_PAD, HIDDEN_SIZE), jnp.bfloat16).at[:INPUT_SIZE, :].set(
        w1.astype(jnp.bfloat16))
    w2_p = jnp.zeros((HIDDEN_SIZE, N_PAD), jnp.bfloat16).at[:, :NUM_CLASSES].set(
        w2.astype(jnp.bfloat16))
    b1_p = b1.astype(jnp.float32)                                   # (1, 128)
    b2_p = jnp.zeros((1, N_PAD), jnp.float32).at[:, :NUM_CLASSES].set(
        b2.astype(jnp.float32))

    # ---- batch tiling -------------------------------------------------------
    tb = min(MAX_TB, _round_up(B, SUBLANE))
    b_pad = _round_up(B, tb)
    if b_pad != B:
        x_p = jnp.zeros((b_pad, K_PAD), jnp.bfloat16).at[:B, :].set(x_p)
    grid = (b_pad // tb,)

    flops = 2 * b_pad * K_PAD * HIDDEN_SIZE + 2 * b_pad * HIDDEN_SIZE * N_PAD
    bytes_accessed = (x_p.size * 2 + w1_p.size * 2 + w2_p.size * 2
                      + b1_p.size * 4 + b2_p.size * 4
                      + b_pad * N_PAD * 4)

    out = pl.pallas_call(
        mlp_kernel,
        out_shape=jax.ShapeDtypeStruct((b_pad, N_PAD), jnp.float32),
        grid=grid,
        in_specs=[
            # activations: tiled over batch
            pl.BlockSpec((tb, K_PAD), lambda i: (i, 0)),
            # weights / biases: full-extent blocks, resident across all tiles
            pl.BlockSpec((K_PAD, HIDDEN_SIZE), lambda i: (0, 0)),
            pl.BlockSpec((1, HIDDEN_SIZE), lambda i: (0, 0)),
            pl.BlockSpec((HIDDEN_SIZE, N_PAD), lambda i: (0, 0)),
            pl.BlockSpec((1, N_PAD), lambda i: (0, 0)),
        ],
        out_specs=pl.BlockSpec((tb, N_PAD), lambda i: (i, 0)),
        compiler_params=pltpu.CompilerParams(
            dimension_semantics=("parallel",)),
        cost_estimate=pl.CostEstimate(
            flops=flops, transcendentals=0, bytes_accessed=bytes_accessed),
    )(x_p, w1_p, b1_p, w2_p, b2_p)

    # strip batch / class padding
    return out[:B, :NUM_CLASSES]


def init_params(key):
    """Deterministic init mimicking PyTorch nn.Linear default (uniform +/-1/sqrt(fan_in))."""
    k1, k2, k3, k4 = jax.random.split(key, 4)
    bound1 = 1.0 / jnp.sqrt(INPUT_SIZE)
    bound2 = 1.0 / jnp.sqrt(HIDDEN_SIZE)
    w1 = jax.random.uniform(k1, (INPUT_SIZE, HIDDEN_SIZE), jnp.float32, -bound1, bound1)
    b1 = jax.random.uniform(k2, (1, HIDDEN_SIZE), jnp.float32, -bound1, bound1)
    w2 = jax.random.uniform(k3, (HIDDEN_SIZE, NUM_CLASSES), jnp.float32, -bound2, bound2)
    b2 = jax.random.uniform(k4, (1, NUM_CLASSES), jnp.float32, -bound2, bound2)
    return w1, b1, w2, b2


if __name__ == "__main__":
    key = jax.random.PRNGKey(0)
    kx, kp = jax.random.split(key)

    batch = 8
    x = jax.random.normal(kx, (batch, INPUT_SIZE), dtype=jnp.float32)
    w1, b1, w2, b2 = init_params(kp)

    out = mlp_forward(x, w1, b1, w2, b2)
    out = jax.block_until_ready(out)

    # Pure-JAX f32 reference of the same math (bf16 kernel -> relaxed tolerance).
    ref = jnp.maximum(x @ w1 + b1, 0.0) @ w2 + b2
    assert out.shape == (batch, NUM_CLASSES)
    assert jnp.allclose(out, ref, atol=5e-2, rtol=5e-2), (
        float(jnp.max(jnp.abs(out - ref))))

    print("KERNEL_OK")
</pallas_src>

<mosaic_0001>
module attributes {stable_mosaic.version = 11 : i64} {
  func.func @mlp_kernel(%arg0: i32, %arg1: memref<8x3712xbf16, #tpu.memory_space<vmem>>, %arg2: memref<3712x128xbf16, #tpu.memory_space<vmem>>, %arg3: memref<1x128xf32, #tpu.memory_space<vmem>>, %arg4: memref<128x128xbf16, #tpu.memory_space<vmem>>, %arg5: memref<1x128xf32, #tpu.memory_space<vmem>>, %arg6: memref<8x128xf32, #tpu.memory_space<vmem>>) attributes {dimension_semantics = [#tpu.dimension_semantics<parallel>], iteration_bounds = array<i64: 1>, scalar_prefetch = 0 : i64, scratch_operands = 0 : i64, tpu.core_type = #tpu.core_type<tc>, window_params = [{transform_indices = @transform_0, window_bounds = array<i64: 8, 3712>}, {pipeline_mode = #tpu.pipeline_mode<synchronous>, transform_indices = @transform_1, window_bounds = array<i64: 3712, 128>}, {pipeline_mode = #tpu.pipeline_mode<synchronous>, transform_indices = @transform_2, window_bounds = array<i64: 1, 128>}, {pipeline_mode = #tpu.pipeline_mode<synchronous>, transform_indices = @transform_3, window_bounds = array<i64: 128, 128>}, {pipeline_mode = #tpu.pipeline_mode<synchronous>, transform_indices = @transform_4, window_bounds = array<i64: 1, 128>}, {transform_indices = @transform_5, window_bounds = array<i64: 8, 128>}]} {
    %c0 = arith.constant 0 : index
    %c0_0 = arith.constant 0 : index
    %0 = vector.load %arg1[%c0, %c0_0] : memref<8x3712xbf16, #tpu.memory_space<vmem>>, vector<8x3712xbf16>
    %c0_1 = arith.constant 0 : index
    %c0_2 = arith.constant 0 : index
    %1 = vector.load %arg2[%c0_1, %c0_2] : memref<3712x128xbf16, #tpu.memory_space<vmem>>, vector<3712x128xbf16>
    %cst = arith.constant dense<0.000000e+00> : vector<8x128xf32>
    %2 = tpu.matmul %0, %1, %cst {dimension_numbers = #tpu.dot_dimension_numbers<[1], [0], [0], [1], [0, 0, 1, 1], [], []>} : vector<8x3712xbf16>, vector<3712x128xbf16>, vector<8x128xf32> -> vector<8x128xf32>
    %c0_3 = arith.constant 0 : index
    %c0_4 = arith.constant 0 : index
    %3 = vector.load %arg3[%c0_3, %c0_4] : memref<1x128xf32, #tpu.memory_space<vmem>>, vector<1x128xf32>
    %4 = vector.broadcast %3 : vector<1x128xf32> to vector<8x128xf32>
    %5 = arith.addf %2, %4 : vector<8x128xf32>
    %cst_5 = arith.constant 0.000000e+00 : f32
    %6 = vector.broadcast %cst_5 : f32 to vector<8x128xf32>
    %7 = arith.maximumf %5, %6 : vector<8x128xf32>
    %8 = arith.truncf %7 : vector<8x128xf32> to vector<8x128xbf16>
    %c0_6 = arith.constant 0 : index
    %c0_7 = arith.constant 0 : index
    %9 = vector.load %arg4[%c0_6, %c0_7] : memref<128x128xbf16, #tpu.memory_space<vmem>>, vector<128x128xbf16>
    %cst_8 = arith.constant dense<0.000000e+00> : vector<8x128xf32>
    %10 = tpu.matmul %8, %9, %cst_8 {dimension_numbers = #tpu.dot_dimension_numbers<[1], [0], [0], [1], [0, 0, 1, 1], [], []>} : vector<8x128xbf16>, vector<128x128xbf16>, vector<8x128xf32> -> vector<8x128xf32>
    %c0_9 = arith.constant 0 : index
    %c0_10 = arith.constant 0 : index
    %11 = vector.load %arg5[%c0_9, %c0_10] : memref<1x128xf32, #tpu.memory_space<vmem>>, vector<1x128xf32>
    %12 = vector.broadcast %11 : vector<1x128xf32> to vector<8x128xf32>
    %13 = arith.addf %10, %12 : vector<8x128xf32>
    %c0_11 = arith.constant 0 : index
    %c0_12 = arith.constant 0 : index
    %14 = vector.load %arg6[%c0_11, %c0_12] : memref<8x128xf32, #tpu.memory_space<vmem>>, vector<8x128xf32>
    tpu.vector_store %arg6[%c0_11, %c0_12], %13 {strides = array<i32>} : memref<8x128xf32, #tpu.memory_space<vmem>>, vector<8x128xf32>,
    return
  }
  func.func @transform_0(%arg0: i32) -> (i32, i32) {
    %c0_i32 = arith.constant 0 : i32
    %c0_i32_0 = arith.constant 0 : i32
    return %arg0, %c0_i32 : i32, i32
  }
  func.func @transform_1(%arg0: i32) -> (i32, i32) {
    %c0_i32 = arith.constant 0 : i32
    %c0_i32_0 = arith.constant 0 : i32
    %c0_i32_1 = arith.constant 0 : i32
    return %c0_i32, %c0_i32_0 : i32, i32
  }
  func.func @transform_2(%arg0: i32) -> (i32, i32) {
    %c0_i32 = arith.constant 0 : i32
    %c0_i32_0 = arith.constant 0 : i32
    %c0_i32_1 = arith.constant 0 : i32
    return %c0_i32, %c0_i32_0 : i32, i32
  }
  func.func @transform_3(%arg0: i32) -> (i32, i32) {
    %c0_i32 = arith.constant 0 : i32
    %c0_i32_0 = arith.constant 0 : i32
    %c0_i32_1 = arith.constant 0 : i32
    return %c0_i32, %c0_i32_0 : i32, i32
  }
  func.func @transform_4(%arg0: i32) -> (i32, i32) {
    %c0_i32 = arith.constant 0 : i32
    %c0_i32_0 = arith.constant 0 : i32
    %c0_i32_1 = arith.constant 0 : i32
    return %c0_i32, %c0_i32_0 : i32, i32
  }
  func.func @transform_5(%arg0: i32) -> (i32, i32) {
    %c0_i32 = arith.constant 0 : i32
    %c0_i32_0 = arith.constant 0 : i32
    return %arg0, %c0_i32 : i32, i32
  }
}

</mosaic_0001>

<llo_original>
// kernel: mlp_forward.1
$region0: #{mlp_forward.1}
  #allocation0 [shape = 'u32[]', space=smem, size = 0x4, offset = 0x4, fixed_abs, tag = 'smem constant byte address 0x4 - core index']
  #allocation1 [shape = 'u32[144,128]{1,0:T(1,128)}', space=vmem, size = 0x12000, scoped, tag = 'internal scratch']
  %s0 = inlined_call_operand.vmem [shape: bf16[8,3712], index: 0, kind: input, shape index: {}]
  %s1 = inlined_call_operand.vmem [shape: bf16[3712,128], index: 1, kind: input, shape index: {}]
  %s2 = inlined_call_operand.vmem [shape: f32[1,128], index: 2, kind: input, shape index: {}]
  %s3 = inlined_call_operand.vmem [shape: bf16[128,128], index: 3, kind: input, shape index: {}]
  %s4 = inlined_call_operand.vmem [shape: f32[1,128], index: 4, kind: input, shape index: {}]
  %s5 = inlined_call_operand.hbm [shape: f32[8,128], index: 5, kind: output, shape index: {}]
  %s6 = sld [smem:[#allocation0]]
  $region30: #{mlp_forward.1} parent=0
    _
  %s8 = ssub.s32 1, %s6
  %s9 = scalar_select 0, %s8, %s6
  $region1: #{mlp_forward.1} parent=0
    #allocation2 [shape = 'u8[4096]{0}', space=vmem, size = 0x1000, scoped, tag = 'output window, operand 0, single buffered']
    #allocation3 [shape = 's32[1]{0}', space=sflag, size = 0x4, scoped, tag = 'scoped memory for mlp_forward.1']
    %10 = vsyncpa [#allocation3], 0
    // Predicated region
    $region2: #{mlp_forward.1} parent=1 // pred_check
      _
    $region3: #{mlp_forward.1} parent=1 // pred_check_branch
      %12 = sbr.rel (0) target = $region5
    $region4: #{mlp_forward.1} parent=1 // pred_region
      _
    $region5: #{mlp_forward.1} parent=1 // pred_fallthru
      _
    // Predicated region
    $region6: #{mlp_forward.1} parent=1 // pred_check
      _
    $region7: #{mlp_forward.1} parent=1 // pred_check_branch
      %14 = sbr.rel (0) target = $region9
    $region8: #{mlp_forward.1} parent=1 // pred_region
      _
    $region9: #{mlp_forward.1} parent=1 // pred_fallthru
      _
    // Predicated region
    $region10: #{mlp_forward.1} parent=1 // pred_check
      _
    $region11: #{mlp_forward.1} parent=1 // pred_check_branch
      %16 = sbr.rel (0) target = $region13
    $region12: #{mlp_forward.1} parent=1 // pred_region
      _
    $region13: #{mlp_forward.1} parent=1 // pred_fallthru
      _
    // Predicated region
    $region14: #{mlp_forward.1} parent=1 // pred_check
      _
    $region15: #{mlp_forward.1} parent=1 // pred_check_branch
      %18 = sbr.rel (0) target = $region17
    $region16: #{mlp_forward.1} parent=1 // pred_region
      _
    $region17: #{mlp_forward.1} parent=1 // pred_fallthru
      _
    // Predicated region
    $region18: #{mlp_forward.1} parent=1 // pred_check
      _
    $region19: #{mlp_forward.1} parent=1 // pred_check_branch
      %20 = sbr.rel (0) target = $region21
    $region20: #{mlp_forward.1} parent=1 // pred_region
      _
    $region21: #{mlp_forward.1} parent=1 // pred_fallthru
      _
    %v22 = vld [vmem:[%s0] sm:$0xff]
    %v23 = vld [vmem:[%s0 + $0x8] sm:$0xff]
    %v24 = vld [vmem:[%s0 + $0x10] sm:$0xff]
    %v25 = vld [vmem:[%s0 + $0x18] sm:$0xff]
    %v26 = vld [vmem:[%s0 + $0x20] sm:$0xff]
    %v27 = vld [vmem:[%s0 + $0x28] sm:$0xff]
    %v28 = vld [vmem:[%s0 + $0x30] sm:$0xff]
    %v29 = vld [vmem:[%s0 + $0x38] sm:$0xff]
    %v30 = vld [vmem:[%s0 + $0x40] sm:$0xff]
    %v31 = vld [vmem:[%s0 + $0x48] sm:$0xff]
    %v32 = vld [vmem:[%s0 + $0x50] sm:$0xff]
    %v33 = vld [vmem:[%s0 + $0x58] sm:$0xff]
    %v34 = vld [vmem:[%s0 + $0x60] sm:$0xff]
    %v35 = vld [vmem:[%s0 + $0x68] sm:$0xff]
    %v36 = vld [vmem:[%s0 + $0x70] sm:$0xf]
    %v37 = vld [vmem:[%s1] sm:$0xf]
    %v38 = vld [vmem:[%s1 + $0x4] sm:$0xf]
    %v39 = vld [vmem:[%s1 + $0x8] sm:$0xf]
    %v40 = vld [vmem:[%s1 + $0xc] sm:$0xf]
    %v41 = vld [vmem:[%s1 + $0x10] sm:$0xf]
    %v42 = vld [vmem:[%s1 + $0x14] sm:$0xf]
    %v43 = vld [vmem:[%s1 + $0x18] sm:$0xf]
    %v44 = vld [vmem:[%s1 + $0x1c] sm:$0xf]
    %v45 = vld [vmem:[%s1 + $0x20] sm:$0xf]
    %v46 = vld [vmem:[%s1 + $0x24] sm:$0xf]
    %v47 = vld [vmem:[%s1 + $0x28] sm:$0xf]
    %v48 = vld [vmem:[%s1 + $0x2c] sm:$0xf]
    %v49 = vld [vmem:[%s1 + $0x30] sm:$0xf]
    %v50 = vld [vmem:[%s1 + $0x34] sm:$0xf]
    %v51 = vld [vmem:[%s1 + $0x38] sm:$0xf]
    %v52 = vld [vmem:[%s1 + $0x3c] sm:$0xf]
    %v53 = vld [vmem:[%s1 + $0x40] sm:$0xf]
    %v54 = vld [vmem:[%s1 + $0x44] sm:$0xf]
    %v55 = vld [vmem:[%s1 + $0x48] sm:$0xf]
    %v56 = vld [vmem:[%s1 + $0x4c] sm:$0xf]
    %v57 = vld [vmem:[%s1 + $0x50] sm:$0xf]
    %v58 = vld [vmem:[%s1 + $0x54] sm:$0xf]
    %v59 = vld [vmem:[%s1 + $0x58] sm:$0xf]
    %v60 = vld [vmem:[%s1 + $0x5c] sm:$0xf]
    %v61 = vld [vmem:[%s1 + $0x60] sm:$0xf]
    %v62 = vld [vmem:[%s1 + $0x64] sm:$0xf]
    %v63 = vld [vmem:[%s1 + $0x68] sm:$0xf]
    %v64 = vld [vmem:[%s1 + $0x6c] sm:$0xf]
    %v65 = vld [vmem:[%s1 + $0x70] sm:$0xf]
    %v66 = vld [vmem:[%s1 + $0x74] sm:$0xf]
    %v67 = vld [vmem:[%s1 + $0x78] sm:$0xf]
    %v68 = vld [vmem:[%s1 + $0x7c] sm:$0xf]
    %v69 = vld [vmem:[%s1 + $0x80] sm:$0xf]
    %v70 = vld [vmem:[%s1 + $0x84] sm:$0xf]
    %v71 = vld [vmem:[%s1 + $0x88] sm:$0xf]
    %v72 = vld [vmem:[%s1 + $0x8c] sm:$0xf]
    %v73 = vld [vmem:[%s1 + $0x90] sm:$0xf]
    %v74 = vld [vmem:[%s1 + $0x94] sm:$0xf]
    %v75 = vld [vmem:[%s1 + $0x98] sm:$0xf]
    %v76 = vld [vmem:[%s1 + $0x9c] sm:$0xf]
    %v77 = vld [vmem:[%s1 + $0xa0] sm:$0xf]
    %v78 = vld [vmem:[%s1 + $0xa4] sm:$0xf]
    %v79 = vld [vmem:[%s1 + $0xa8] sm:$0xf]
    %v80 = vld [vmem:[%s1 + $0xac] sm:$0xf]
    %v81 = vld [vmem:[%s1 + $0xb0] sm:$0xf]
    %v82 = vld [vmem:[%s1 + $0xb4] sm:$0xf]
    %v83 = vld [vmem:[%s1 + $0xb8] sm:$0xf]
    %v84 = vld [vmem:[%s1 + $0xbc] sm:$0xf]
    %v85 = vld [vmem:[%s1 + $0xc0] sm:$0xf]
    %v86 = vld [vmem:[%s1 + $0xc4] sm:$0xf]
    %v87 = vld [vmem:[%s1 + $0xc8] sm:$0xf]
    %v88 = vld [vmem:[%s1 + $0xcc] sm:$0xf]
    %v89 = vld [vmem:[%s1 + $0xd0] sm:$0xf]
    %v90 = vld [vmem:[%s1 + $0xd4] sm:$0xf]
    %v91 = vld [vmem:[%s1 + $0xd8] sm:$0xf]
    %v92 = vld [vmem:[%s1 + $0xdc] sm:$0xf]
    %v93 = vld [vmem:[%s1 + $0xe0] sm:$0xf]
    %v94 = vld [vmem:[%s1 + $0xe4] sm:$0xf]
    %v95 = vld [vmem:[%s1 + $0xe8] sm:$0xf]
    %v96 = vld [vmem:[%s1 + $0xec] sm:$0xf]
    %v97 = vld [vmem:[%s1 + $0xf0] sm:$0xf]
    %v98 = vld [vmem:[%s1 + $0xf4] sm:$0xf]
    %v99 = vld [vmem:[%s1 + $0xf8] sm:$0xf]
    %v100 = vld [vmem:[%s1 + $0xfc] sm:$0xf]
    %v101 = vld [vmem:[%s1 + $0x100] sm:$0xf]
    %v102 = vld [vmem:[%s1 + $0x104] sm:$0xf]
    %v103 = vld [vmem:[%s1 + $0x108] sm:$0xf]
    %v104 = vld [vmem:[%s1 + $0x10c] sm:$0xf]
    %v105 = vld [vmem:[%s1 + $0x110] sm:$0xf]
    %v106 = vld [vmem:[%s1 + $0x114] sm:$0xf]
    %v107 = vld [vmem:[%s1 + $0x118] sm:$0xf]
    %v108 = vld [vmem:[%s1 + $0x11c] sm:$0xf]
    %v109 = vld [vmem:[%s1 + $0x120] sm:$0xf]
    %v110 = vld [vmem:[%s1 + $0x124] sm:$0xf]
    %v111 = vld [vmem:[%s1 + $0x128] sm:$0xf]
    %v112 = vld [vmem:[%s1 + $0x12c] sm:$0xf]
    %v113 = vld [vmem:[%s1 + $0x130] sm:$0xf]
    %v114 = vld [vmem:[%s1 + $0x134] sm:$0xf]
    %v115 = vld [vmem:[%s1 + $0x138] sm:$0xf]
    %v116 = vld [vmem:[%s1 + $0x13c] sm:$0xf]
    %v117 = vld [vmem:[%s1 + $0x140] sm:$0xf]
    %v118 = vld [vmem:[%s1 + $0x144] sm:$0xf]
    %v119 = vld [vmem:[%s1 + $0x148] sm:$0xf]
    %v120 = vld [vmem:[%s1 + $0x14c] sm:$0xf]
    %v121 = vld [vmem:[%s1 + $0x150] sm:$0xf]
    %v122 = vld [vmem:[%s1 + $0x154] sm:$0xf]
    %v123 = vld [vmem:[%s1 + $0x158] sm:$0xf]
    %v124 = vld [vmem:[%s1 + $0x15c] sm:$0xf]
    %v125 = vld [vmem:[%s1 + $0x160] sm:$0xf]
    %v126 = vld [vmem:[%s1 + $0x164] sm:$0xf]
    %v127 = vld [vmem:[%s1 + $0x168] sm:$0xf]
    %v128 = vld [vmem:[%s1 + $0x16c] sm:$0xf]
    %v129 = vld [vmem:[%s1 + $0x170] sm:$0xf]
    %v130 = vld [vmem:[%s1 + $0x174] sm:$0xf]
    %v131 = vld [vmem:[%s1 + $0x178] sm:$0xf]
    %v132 = vld [vmem:[%s1 + $0x17c] sm:$0xf]
    %v133 = vld [vmem:[%s1 + $0x180] sm:$0xf]
    %v134 = vld [vmem:[%s1 + $0x184] sm:$0xf]
    %v135 = vld [vmem:[%s1 + $0x188] sm:$0xf]
    %v136 = vld [vmem:[%s1 + $0x18c] sm:$0xf]
    %v137 = vld [vmem:[%s1 + $0x190] sm:$0xf]
    %v138 = vld [vmem:[%s1 + $0x194] sm:$0xf]
    %v139 = vld [vmem:[%s1 + $0x198] sm:$0xf]
    %v140 = vld [vmem:[%s1 + $0x19c] sm:$0xf]
    %v141 = vld [vmem:[%s1 + $0x1a0] sm:$0xf]
    %v142 = vld [vmem:[%s1 + $0x1a4] sm:$0xf]
    %v143 = vld [vmem:[%s1 + $0x1a8] sm:$0xf]
    %v144 = vld [vmem:[%s1 + $0x1ac] sm:$0xf]
    %v145 = vld [vmem:[%s1 + $0x1b0] sm:$0xf]
    %v146 = vld [vmem:[%s1 + $0x1b4] sm:$0xf]
    %v147 = vld [vmem:[%s1 + $0x1b8] sm:$0xf]
    %v148 = vld [vmem:[%s1 + $0x1bc] sm:$0xf]
    %v149 = vld [vmem:[%s1 + $0x1c0] sm:$0xf]
    %v150 = vld [vmem:[%s1 + $0x1c4] sm:$0xf]
    %v151 = vld [vmem:[%s1 + $0x1c8] sm:$0xf]
    %v152 = vld [vmem:[%s1 + $0x1cc] sm:$0xf]
    %v153 = vld [vmem:[%s1 + $0x1d0] sm:$0xf]
    %v154 = vld [vmem:[%s1 + $0x1d4] sm:$0xf]
    %v155 = vld [vmem:[%s1 + $0x1d8] sm:$0xf]
    %v156 = vld [vmem:[%s1 + $0x1dc] sm:$0xf]
    %v157 = vld [vmem:[%s1 + $0x1e0] sm:$0xf]
    %v158 = vld [vmem:[%s1 + $0x1e4] sm:$0xf]
    %v159 = vld [vmem:[%s1 + $0x1e8] sm:$0xf]
    %v160 = vld [vmem:[%s1 + $0x1ec] sm:$0xf]
    %v161 = vld [vmem:[%s1 + $0x1f0] sm:$0xf]
    %v162 = vld [vmem:[%s1 + $0x1f4] sm:$0xf]
    %v163 = vld [vmem:[%s1 + $0x1f8] sm:$0xf]
    %v164 = vld [vmem:[%s1 + $0x1fc] sm:$0xf]
    %v165 = vld [vmem:[%s1 + $0x200] sm:$0xf]
    %v166 = vld [vmem:[%s1 + $0x204] sm:$0xf]
    %v167 = vld [vmem:[%s1 + $0x208] sm:$0xf]
    %v168 = vld [vmem:[%s1 + $0x20c] sm:$0xf]
    %v169 = vld [vmem:[%s1 + $0x210] sm:$0xf]
    %v170 = vld [vmem:[%s1 + $0x214] sm:$0xf]
    %v171 = vld [vmem:[%s1 + $0x218] sm:$0xf]
    %v172 = vld [vmem:[%s1 + $0x21c] sm:$0xf]
    %v173 = vld [vmem:[%s1 + $0x220] sm:$0xf]
    %v174 = vld [vmem:[%s1 + $0x224] sm:$0xf]
    %v175 = vld [vmem:[%s1 + $0x228] sm:$0xf]
    %v176 = vld [vmem:[%s1 + $0x22c] sm:$0xf]
    %v177 = vld [vmem:[%s1 + $0x230] sm:$0xf]
    %v178 = vld [vmem:[%s1 + $0x234] sm:$0xf]
    %v179 = vld [vmem:[%s1 + $0x238] sm:$0xf]
    %v180 = vld [vmem:[%s1 + $0x23c] sm:$0xf]
    %v181 = vld [vmem:[%s1 + $0x240] sm:$0xf]
    %v182 = vld [vmem:[%s1 + $0x244] sm:$0xf]
    %v183 = vld [vmem:[%s1 + $0x248] sm:$0xf]
    %v184 = vld [vmem:[%s1 + $0x24c] sm:$0xf]
    %v185 = vld [vmem:[%s1 + $0x250] sm:$0xf]
    %v186 = vld [vmem:[%s1 + $0x254] sm:$0xf]
    %v187 = vld [vmem:[%s1 + $0x258] sm:$0xf]
    %v188 = vld [vmem:[%s1 + $0x25c] sm:$0xf]
    %v189 = vld [vmem:[%s1 + $0x260] sm:$0xf]
    %v190 = vld [vmem:[%s1 + $0x264] sm:$0xf]
    %v191 = vld [vmem:[%s1 + $0x268] sm:$0xf]
    %v192 = vld [vmem:[%s1 + $0x26c] sm:$0xf]
    %v193 = vld [vmem:[%s1 + $0x270] sm:$0xf]
    %v194 = vld [vmem:[%s1 + $0x274] sm:$0xf]
    %v195 = vld [vmem:[%s1 + $0x278] sm:$0xf]
    %v196 = vld [vmem:[%s1 + $0x27c] sm:$0xf]
    %v197 = vld [vmem:[%s1 + $0x280] sm:$0xf]
    %v198 = vld [vmem:[%s1 + $0x284] sm:$0xf]
    %v199 = vld [vmem:[%s1 + $0x288] sm:$0xf]
    %v200 = vld [vmem:[%s1 + $0x28c] sm:$0xf]
    %v201 = vld [vmem:[%s1 + $0x290] sm:$0xf]
    %v202 = vld [vmem:[%s1 + $0x294] sm:$0xf]
    %v203 = vld [vmem:[%s1 + $0x298] sm:$0xf]
    %v204 = vld [vmem:[%s1 + $0x29c] sm:$0xf]
    %v205 = vld [vmem:[%s1 + $0x2a0] sm:$0xf]
    %v206 = vld [vmem:[%s1 + $0x2a4] sm:$0xf]
    %v207 = vld [vmem:[%s1 + $0x2a8] sm:$0xf]
    %v208 = vld [vmem:[%s1 + $0x2ac] sm:$0xf]
    %v209 = vld [vmem:[%s1 + $0x2b0] sm:$0xf]
    %v210 = vld [vmem:[%s1 + $0x2b4] sm:$0xf]
    %v211 = vld [vmem:[%s1 + $0x2b8] sm:$0xf]
    %v212 = vld [vmem:[%s1 + $0x2bc] sm:$0xf]
    %v213 = vld [vmem:[%s1 + $0x2c0] sm:$0xf]
    %v214 = vld [vmem:[%s1 + $0x2c4] sm:$0xf]
    %v215 = vld [vmem:[%s1 + $0x2c8] sm:$0xf]
    %v216 = vld [vmem:[%s1 + $0x2cc] sm:$0xf]
    %v217 = vld [vmem:[%s1 + $0x2d0] sm:$0xf]
    %v218 = vld [vmem:[%s1 + $0x2d4] sm:$0xf]
    %v219 = vld [vmem:[%s1 + $0x2d8] sm:$0xf]
    %v220 = vld [vmem:[%s1 + $0x2dc] sm:$0xf]
    %v221 = vld [vmem:[%s1 + $0x2e0] sm:$0xf]
    %v222 = vld [vmem:[%s1 + $0x2e4] sm:$0xf]
    %v223 = vld [vmem:[%s1 + $0x2e8] sm:$0xf]
    %v224 = vld [vmem:[%s1 + $0x2ec] sm:$0xf]
    %v225 = vld [vmem:[%s1 + $0x2f0] sm:$0xf]
    %v226 = vld [vmem:[%s1 + $0x2f4] sm:$0xf]
    %v227 = vld [vmem:[%s1 + $0x2f8] sm:$0xf]
    %v228 = vld [vmem:[%s1 + $0x2fc] sm:$0xf]
    %v229 = vld [vmem:[%s1 + $0x300] sm:$0xf]
    %v230 = vld [vmem:[%s1 + $0x304] sm:$0xf]
    %v231 = vld [vmem:[%s1 + $0x308] sm:$0xf]
    %v232 = vld [vmem:[%s1 + $0x30c] sm:$0xf]
    %v233 = vld [vmem:[%s1 + $0x310] sm:$0xf]
    %v234 = vld [vmem:[%s1 + $0x314] sm:$0xf]
    %v235 = vld [vmem:[%s1 + $0x318] sm:$0xf]
    %v236 = vld [vmem:[%s1 + $0x31c] sm:$0xf]
    %v237 = vld [vmem:[%s1 + $0x320] sm:$0xf]
    %v238 = vld [vmem:[%s1 + $0x324] sm:$0xf]
    %v239 = vld [vmem:[%s1 + $0x328] sm:$0xf]
    %v240 = vld [vmem:[%s1 + $0x32c] sm:$0xf]
    %v241 = vld [vmem:[%s1 + $0x330] sm:$0xf]
    %v242 = vld [vmem:[%s1 + $0x334] sm:$0xf]
    %v243 = vld [vmem:[%s1 + $0x338] sm:$0xf]
    %v244 = vld [vmem:[%s1 + $0x33c] sm:$0xf]
    %v245 = vld [vmem:[%s1 + $0x340] sm:$0xf]
    %v246 = vld [vmem:[%s1 + $0x344] sm:$0xf]
    %v247 = vld [vmem:[%s1 + $0x348] sm:$0xf]
    %v248 = vld [vmem:[%s1 + $0x34c] sm:$0xf]
    %v249 = vld [vmem:[%s1 + $0x350] sm:$0xf]
    %v250 = vld [vmem:[%s1 + $0x354] sm:$0xf]
    %v251 = vld [vmem:[%s1 + $0x358] sm:$0xf]
    %v252 = vld [vmem:[%s1 + $0x35c] sm:$0xf]
    %v253 = vld [vmem:[%s1 + $0x360] sm:$0xf]
    %v254 = vld [vmem:[%s1 + $0x364] sm:$0xf]
    %v255 = vld [vmem:[%s1 + $0x368] sm:$0xf]
    %v256 = vld [vmem:[%s1 + $0x36c] sm:$0xf]
    %v257 = vld [vmem:[%s1 + $0x370] sm:$0xf]
    %v258 = vld [vmem:[%s1 + $0x374] sm:$0xf]
    %v259 = vld [vmem:[%s1 + $0x378] sm:$0xf]
    %v260 = vld [vmem:[%s1 + $0x37c] sm:$0xf]
    %v261 = vld [vmem:[%s1 + $0x380] sm:$0xf]
    %v262 = vld [vmem:[%s1 + $0x384] sm:$0xf]
    %v263 = vld [vmem:[%s1 + $0x388] sm:$0xf]
    %v264 = vld [vmem:[%s1 + $0x38c] sm:$0xf]
    %v265 = vld [vmem:[%s1 + $0x390] sm:$0xf]
    %v266 = vld [vmem:[%s1 + $0x394] sm:$0xf]
    %v267 = vld [vmem:[%s1 + $0x398] sm:$0xf]
    %v268 = vld [vmem:[%s1 + $0x39c] sm:$0xf]
    %v269 = vld [vmem:[%s1 + $0x3a0] sm:$0xf]
    %v270 = vld [vmem:[%s1 + $0x3a4] sm:$0xf]
    %v271 = vld [vmem:[%s1 + $0x3a8] sm:$0xf]
    %v272 = vld [vmem:[%s1 + $0x3ac] sm:$0xf]
    %v273 = vld [vmem:[%s1 + $0x3b0] sm:$0xf]
    %v274 = vld [vmem:[%s1 + $0x3b4] sm:$0xf]
    %v275 = vld [vmem:[%s1 + $0x3b8] sm:$0xf]
    %v276 = vld [vmem:[%s1 + $0x3bc] sm:$0xf]
    %v277 = vld [vmem:[%s1 + $0x3c0] sm:$0xf]
    %v278 = vld [vmem:[%s1 + $0x3c4] sm:$0xf]
    %v279 = vld [vmem:[%s1 + $0x3c8] sm:$0xf]
    %v280 = vld [vmem:[%s1 + $0x3cc] sm:$0xf]
    %v281 = vld [vmem:[%s1 + $0x3d0] sm:$0xf]
    %v282 = vld [vmem:[%s1 + $0x3d4] sm:$0xf]
    %v283 = vld [vmem:[%s1 + $0x3d8] sm:$0xf]
    %v284 = vld [vmem:[%s1 + $0x3dc] sm:$0xf]
    %v285 = vld [vmem:[%s1 + $0x3e0] sm:$0xf]
    %v286 = vld [vmem:[%s1 + $0x3e4] sm:$0xf]
    %v287 = vld [vmem:[%s1 + $0x3e8] sm:$0xf]
    %v288 = vld [vmem:[%s1 + $0x3ec] sm:$0xf]
    %v289 = vld [vmem:[%s1 + $0x3f0] sm:$0xf]
    %v290 = vld [vmem:[%s1 + $0x3f4] sm:$0xf]
    %v291 = vld [vmem:[%s1 + $0x3f8] sm:$0xf]
    %v292 = vld [vmem:[%s1 + $0x3fc] sm:$0xf]
    %v293 = vld [vmem:[%s1 + $0x400] sm:$0xf]
    %v294 = vld [vmem:[%s1 + $0x404] sm:$0xf]
    %v295 = vld [vmem:[%s1 + $0x408] sm:$0xf]
    %v296 = vld [vmem:[%s1 + $0x40c] sm:$0xf]
    %v297 = vld [vmem:[%s1 + $0x410] sm:$0xf]
    %v298 = vld [vmem:[%s1 + $0x414] sm:$0xf]
    %v299 = vld [vmem:[%s1 + $0x418] sm:$0xf]
    %v300 = vld [vmem:[%s1 + $0x41c] sm:$0xf]
    %v301 = vld [vmem:[%s1 + $0x420] sm:$0xf]
    %v302 = vld [vmem:[%s1 + $0x424] sm:$0xf]
    %v303 = vld [vmem:[%s1 + $0x428] sm:$0xf]
    %v304 = vld [vmem:[%s1 + $0x42c] sm:$0xf]
    %v305 = vld [vmem:[%s1 + $0x430] sm:$0xf]
    %v306 = vld [vmem:[%s1 + $0x434] sm:$0xf]
    %v307 = vld [vmem:[%s1 + $0x438] sm:$0xf]
    %v308 = vld [vmem:[%s1 + $0x43c] sm:$0xf]
    %v309 = vld [vmem:[%s1 + $0x440] sm:$0xf]
    %v310 = vld [vmem:[%s1 + $0x444] sm:$0xf]
    %v311 = vld [vmem:[%s1 + $0x448] sm:$0xf]
    %v312 = vld [vmem:[%s1 + $0x44c] sm:$0xf]
    %v313 = vld [vmem:[%s1 + $0x450] sm:$0xf]
    %v314 = vld [vmem:[%s1 + $0x454] sm:$0xf]
    %v315 = vld [vmem:[%s1 + $0x458] sm:$0xf]
    %v316 = vld [vmem:[%s1 + $0x45c] sm:$0xf]
    %v317 = vld [vmem:[%s1 + $0x460] sm:$0xf]
    %v318 = vld [vmem:[%s1 + $0x464] sm:$0xf]
    %v319 = vld [vmem:[%s1 + $0x468] sm:$0xf]
    %v320 = vld [vmem:[%s1 + $0x46c] sm:$0xf]
    %v321 = vld [vmem:[%s1 + $0x470] sm:$0xf]
    %v322 = vld [vmem:[%s1 + $0x474] sm:$0xf]
    %v323 = vld [vmem:[%s1 + $0x478] sm:$0xf]
    %v324 = vld [vmem:[%s1 + $0x47c] sm:$0xf]
    %v325 = vld [vmem:[%s1 + $0x480] sm:$0xf]
    %v326 = vld [vmem:[%s1 + $0x484] sm:$0xf]
    %v327 = vld [vmem:[%s1 + $0x488] sm:$0xf]
    %v328 = vld [vmem:[%s1 + $0x48c] sm:$0xf]
    %v329 = vld [vmem:[%s1 + $0x490] sm:$0xf]
    %v330 = vld [vmem:[%s1 + $0x494] sm:$0xf]
    %v331 = vld [vmem:[%s1 + $0x498] sm:$0xf]
    %v332 = vld [vmem:[%s1 + $0x49c] sm:$0xf]
    %v333 = vld [vmem:[%s1 + $0x4a0] sm:$0xf]
    %v334 = vld [vmem:[%s1 + $0x4a4] sm:$0xf]
    %v335 = vld [vmem:[%s1 + $0x4a8] sm:$0xf]
    %v336 = vld [vmem:[%s1 + $0x4ac] sm:$0xf]
    %v337 = vld [vmem:[%s1 + $0x4b0] sm:$0xf]
    %v338 = vld [vmem:[%s1 + $0x4b4] sm:$0xf]
    %v339 = vld [vmem:[%s1 + $0x4b8] sm:$0xf]
    %v340 = vld [vmem:[%s1 + $0x4bc] sm:$0xf]
    %v341 = vld [vmem:[%s1 + $0x4c0] sm:$0xf]
    %v342 = vld [vmem:[%s1 + $0x4c4] sm:$0xf]
    %v343 = vld [vmem:[%s1 + $0x4c8] sm:$0xf]
    %v344 = vld [vmem:[%s1 + $0x4cc] sm:$0xf]
    %v345 = vld [vmem:[%s1 + $0x4d0] sm:$0xf]
    %v346 = vld [vmem:[%s1 + $0x4d4] sm:$0xf]
    %v347 = vld [vmem:[%s1 + $0x4d8] sm:$0xf]
    %v348 = vld [vmem:[%s1 + $0x4dc] sm:$0xf]
    %v349 = vld [vmem:[%s1 + $0x4e0] sm:$0xf]
    %v350 = vld [vmem:[%s1 + $0x4e4] sm:$0xf]
    %v351 = vld [vmem:[%s1 + $0x4e8] sm:$0xf]
    %v352 = vld [vmem:[%s1 + $0x4ec] sm:$0xf]
    %v353 = vld [vmem:[%s1 + $0x4f0] sm:$0xf]
    %v354 = vld [vmem:[%s1 + $0x4f4] sm:$0xf]
    %v355 = vld [vmem:[%s1 + $0x4f8] sm:$0xf]
    %v356 = vld [vmem:[%s1 + $0x4fc] sm:$0xf]
    %v357 = vld [vmem:[%s1 + $0x500] sm:$0xf]
    %v358 = vld [vmem:[%s1 + $0x504] sm:$0xf]
    %v359 = vld [vmem:[%s1 + $0x508] sm:$0xf]
    %v360 = vld [vmem:[%s1 + $0x50c] sm:$0xf]
    %v361 = vld [vmem:[%s1 + $0x510] sm:$0xf]
    %v362 = vld [vmem:[%s1 + $0x514] sm:$0xf]
    %v363 = vld [vmem:[%s1 + $0x518] sm:$0xf]
    %v364 = vld [vmem:[%s1 + $0x51c] sm:$0xf]
    %v365 = vld [vmem:[%s1 + $0x520] sm:$0xf]
    %v366 = vld [vmem:[%s1 + $0x524] sm:$0xf]
    %v367 = vld [vmem:[%s1 + $0x528] sm:$0xf]
    %v368 = vld [vmem:[%s1 + $0x52c] sm:$0xf]
    %v369 = vld [vmem:[%s1 + $0x530] sm:$0xf]
    %v370 = vld [vmem:[%s1 + $0x534] sm:$0xf]
    %v371 = vld [vmem:[%s1 + $0x538] sm:$0xf]
    %v372 = vld [vmem:[%s1 + $0x53c] sm:$0xf]
    %v373 = vld [vmem:[%s1 + $0x540] sm:$0xf]
    %v374 = vld [vmem:[%s1 + $0x544] sm:$0xf]
    %v375 = vld [vmem:[%s1 + $0x548] sm:$0xf]
    %v376 = vld [vmem:[%s1 + $0x54c] sm:$0xf]
    %v377 = vld [vmem:[%s1 + $0x550] sm:$0xf]
    %v378 = vld [vmem:[%s1 + $0x554] sm:$0xf]
    %v379 = vld [vmem:[%s1 + $0x558] sm:$0xf]
    %v380 = vld [vmem:[%s1 + $0x55c] sm:$0xf]
    %v381 = vld [vmem:[%s1 + $0x560] sm:$0xf]
    %v382 = vld [vmem:[%s1 + $0x564] sm:$0xf]
    %v383 = vld [vmem:[%s1 + $0x568] sm:$0xf]
    %v384 = vld [vmem:[%s1 + $0x56c] sm:$0xf]
    %v385 = vld [vmem:[%s1 + $0x570] sm:$0xf]
    %v386 = vld [vmem:[%s1 + $0x574] sm:$0xf]
    %v387 = vld [vmem:[%s1 + $0x578] sm:$0xf]
    %v388 = vld [vmem:[%s1 + $0x57c] sm:$0xf]
    %v389 = vld [vmem:[%s1 + $0x580] sm:$0xf]
    %v390 = vld [vmem:[%s1 + $0x584] sm:$0xf]
    %v391 = vld [vmem:[%s1 + $0x588] sm:$0xf]
    %v392 = vld [vmem:[%s1 + $0x58c] sm:$0xf]
    %v393 = vld [vmem:[%s1 + $0x590] sm:$0xf]
    %v394 = vld [vmem:[%s1 + $0x594] sm:$0xf]
    %v395 = vld [vmem:[%s1 + $0x598] sm:$0xf]
    %v396 = vld [vmem:[%s1 + $0x59c] sm:$0xf]
    %v397 = vld [vmem:[%s1 + $0x5a0] sm:$0xf]
    %v398 = vld [vmem:[%s1 + $0x5a4] sm:$0xf]
    %v399 = vld [vmem:[%s1 + $0x5a8] sm:$0xf]
    %v400 = vld [vmem:[%s1 + $0x5ac] sm:$0xf]
    %v401 = vld [vmem:[%s1 + $0x5b0] sm:$0xf]
    %v402 = vld [vmem:[%s1 + $0x5b4] sm:$0xf]
    %v403 = vld [vmem:[%s1 + $0x5b8] sm:$0xf]
    %v404 = vld [vmem:[%s1 + $0x5bc] sm:$0xf]
    %v405 = vld [vmem:[%s1 + $0x5c0] sm:$0xf]
    %v406 = vld [vmem:[%s1 + $0x5c4] sm:$0xf]
    %v407 = vld [vmem:[%s1 + $0x5c8] sm:$0xf]
    %v408 = vld [vmem:[%s1 + $0x5cc] sm:$0xf]
    %v409 = vld [vmem:[%s1 + $0x5d0] sm:$0xf]
    %v410 = vld [vmem:[%s1 + $0x5d4] sm:$0xf]
    %v411 = vld [vmem:[%s1 + $0x5d8] sm:$0xf]
    %v412 = vld [vmem:[%s1 + $0x5dc] sm:$0xf]
    %v413 = vld [vmem:[%s1 + $0x5e0] sm:$0xf]
    %v414 = vld [vmem:[%s1 + $0x5e4] sm:$0xf]
    %v415 = vld [vmem:[%s1 + $0x5e8] sm:$0xf]
    %v416 = vld [vmem:[%s1 + $0x5ec] sm:$0xf]
    %v417 = vld [vmem:[%s1 + $0x5f0] sm:$0xf]
    %v418 = vld [vmem:[%s1 + $0x5f4] sm:$0xf]
    %v419 = vld [vmem:[%s1 + $0x5f8] sm:$0xf]
    %v420 = vld [vmem:[%s1 + $0x5fc] sm:$0xf]
    %v421 = vld [vmem:[%s1 + $0x600] sm:$0xf]
    %v422 = vld [vmem:[%s1 + $0x604] sm:$0xf]
    %v423 = vld [vmem:[%s1 + $0x608] sm:$0xf]
    %v424 = vld [vmem:[%s1 + $0x60c] sm:$0xf]
    %v425 = vld [vmem:[%s1 + $0x610] sm:$0xf]
    %v426 = vld [vmem:[%s1 + $0x614] sm:$0xf]
    %v427 = vld [vmem:[%s1 + $0x618] sm:$0xf]
    %v428 = vld [vmem:[%s1 + $0x61c] sm:$0xf]
    %v429 = vld [vmem:[%s1 + $0x620] sm:$0xf]
    %v430 = vld [vmem:[%s1 + $0x624] sm:$0xf]
    %v431 = vld [vmem:[%s1 + $0x628] sm:$0xf]
    %v432 = vld [vmem:[%s1 + $0x62c] sm:$0xf]
    %v433 = vld [vmem:[%s1 + $0x630] sm:$0xf]
    %v434 = vld [vmem:[%s1 + $0x634] sm:$0xf]
    %v435 = vld [vmem:[%s1 + $0x638] sm:$0xf]
    %v436 = vld [vmem:[%s1 + $0x63c] sm:$0xf]
    %v437 = vld [vmem:[%s1 + $0x640] sm:$0xf]
    %v438 = vld [vmem:[%s1 + $0x644] sm:$0xf]
    %v439 = vld [vmem:[%s1 + $0x648] sm:$0xf]
    %v440 = vld [vmem:[%s1 + $0x64c] sm:$0xf]
    %v441 = vld [vmem:[%s1 + $0x650] sm:$0xf]
    %v442 = vld [vmem:[%s1 + $0x654] sm:$0xf]
    %v443 = vld [vmem:[%s1 + $0x658] sm:$0xf]
    %v444 = vld [vmem:[%s1 + $0x65c] sm:$0xf]
    %v445 = vld [vmem:[%s1 + $0x660] sm:$0xf]
    %v446 = vld [vmem:[%s1 + $0x664] sm:$0xf]
    %v447 = vld [vmem:[%s1 + $0x668] sm:$0xf]
    %v448 = vld [vmem:[%s1 + $0x66c] sm:$0xf]
    %v449 = vld [vmem:[%s1 + $0x670] sm:$0xf]
    %v450 = vld [vmem:[%s1 + $0x674] sm:$0xf]
    %v451 = vld [vmem:[%s1 + $0x678] sm:$0xf]
    %v452 = vld [vmem:[%s1 + $0x67c] sm:$0xf]
    %v453 = vld [vmem:[%s1 + $0x680] sm:$0xf]
    %v454 = vld [vmem:[%s1 + $0x684] sm:$0xf]
    %v455 = vld [vmem:[%s1 + $0x688] sm:$0xf]
    %v456 = vld [vmem:[%s1 + $0x68c] sm:$0xf]
    %v457 = vld [vmem:[%s1 + $0x690] sm:$0xf]
    %v458 = vld [vmem:[%s1 + $0x694] sm:$0xf]
    %v459 = vld [vmem:[%s1 + $0x698] sm:$0xf]
    %v460 = vld [vmem:[%s1 + $0x69c] sm:$0xf]
    %v461 = vld [vmem:[%s1 + $0x6a0] sm:$0xf]
    %v462 = vld [vmem:[%s1 + $0x6a4] sm:$0xf]
    %v463 = vld [vmem:[%s1 + $0x6a8] sm:$0xf]
    %v464 = vld [vmem:[%s1 + $0x6ac] sm:$0xf]
    %v465 = vld [vmem:[%s1 + $0x6b0] sm:$0xf]
    %v466 = vld [vmem:[%s1 + $0x6b4] sm:$0xf]
    %v467 = vld [vmem:[%s1 + $0x6b8] sm:$0xf]
    %v468 = vld [vmem:[%s1 + $0x6bc] sm:$0xf]
    %v469 = vld [vmem:[%s1 + $0x6c0] sm:$0xf]
    %v470 = vld [vmem:[%s1 + $0x6c4] sm:$0xf]
    %v471 = vld [vmem:[%s1 + $0x6c8] sm:$0xf]
    %v472 = vld [vmem:[%s1 + $0x6cc] sm:$0xf]
    %v473 = vld [vmem:[%s1 + $0x6d0] sm:$0xf]
    %v474 = vld [vmem:[%s1 + $0x6d4] sm:$0xf]
    %v475 = vld [vmem:[%s1 + $0x6d8] sm:$0xf]
    %v476 = vld [vmem:[%s1 + $0x6dc] sm:$0xf]
    %v477 = vld [vmem:[%s1 + $0x6e0] sm:$0xf]
    %v478 = vld [vmem:[%s1 + $0x6e4] sm:$0xf]
    %v479 = vld [vmem:[%s1 + $0x6e8] sm:$0xf]
    %v480 = vld [vmem:[%s1 + $0x6ec] sm:$0xf]
    %v481 = vld [vmem:[%s1 + $0x6f0] sm:$0xf]
    %v482 = vld [vmem:[%s1 + $0x6f4] sm:$0xf]
    %v483 = vld [vmem:[%s1 + $0x6f8] sm:$0xf]
    %v484 = vld [vmem:[%s1 + $0x6fc] sm:$0xf]
    %v485 = vld [vmem:[%s1 + $0x700] sm:$0xf]
    %v486 = vld [vmem:[%s1 + $0x704] sm:$0xf]
    %v487 = vld [vmem:[%s1 + $0x708] sm:$0xf]
    %v488 = vld [vmem:[%s1 + $0x70c] sm:$0xf]
    %v489 = vld [vmem:[%s1 + $0x710] sm:$0xf]
    %v490 = vld [vmem:[%s1 + $0x714] sm:$0xf]
    %v491 = vld [vmem:[%s1 + $0x718] sm:$0xf]
    %v492 = vld [vmem:[%s1 + $0x71c] sm:$0xf]
    %v493 = vld [vmem:[%s1 + $0x720] sm:$0xf]
    %v494 = vld [vmem:[%s1 + $0x724] sm:$0xf]
    %v495 = vld [vmem:[%s1 + $0x728] sm:$0xf]
    %v496 = vld [vmem:[%s1 + $0x72c] sm:$0xf]
    %v497 = vld [vmem:[%s1 + $0x730] sm:$0xf]
    %v498 = vld [vmem:[%s1 + $0x734] sm:$0xf]
    %v499 = vld [vmem:[%s1 + $0x738] sm:$0xf]
    %v500 = vld [vmem:[%s1 + $0x73c] sm:$0xf]
    %v501 = vld [vmem:[%s2] sm:$0x1]
    %v503 = vlaneseq
    %v504 = vshrl.u32 %v503, 7
    %v505 = vsub.s32 0, %v504
    %v506 = vrot.slane %v501, %v505
    %v523 = vunpack.c.l.b16 %v22
    %v524 = vunpack.c.h.b16 %v22
    %v525 = vunpack.c.l.b16 %v23
    %v526 = vunpack.c.h.b16 %v23
    %v527 = vunpack.c.l.b16 %v24
    %v528 = vunpack.c.h.b16 %v24
    %v529 = vunpack.c.l.b16 %v25
    %v530 = vunpack.c.h.b16 %v25
    %v531 = vunpack.c.l.b16 %v26
    %v532 = vunpack.c.h.b16 %v26
    %v533 = vunpack.c.l.b16 %v27
    %v534 = vunpack.c.h.b16 %v27
    %v535 = vunpack.c.l.b16 %v28
    %v536 = vunpack.c.h.b16 %v28
    %v537 = vunpack.c.l.b16 %v29
    %v538 = vunpack.c.h.b16 %v29
    %v539 = vunpack.c.l.b16 %v30
    %v540 = vunpack.c.h.b16 %v30
    %v541 = vunpack.c.l.b16 %v31
    %v542 = vunpack.c.h.b16 %v31
    %v543 = vunpack.c.l.b16 %v32
    %v544 = vunpack.c.h.b16 %v32
    %v545 = vunpack.c.l.b16 %v33
    %v546 = vunpack.c.h.b16 %v33
    %v547 = vunpack.c.l.b16 %v34
    %v548 = vunpack.c.h.b16 %v34
    %v549 = vunpack.c.l.b16 %v35
    %v550 = vunpack.c.h.b16 %v35
    %v551 = vunpack.c.l.b16 %v36
    %v552 = vpack.c.b16 %v523, %v523
    %v553 = vpack.c.b16 %v524, %v524
    %v554 = vpack.c.b16 %v525, %v525
    %v555 = vpack.c.b16 %v526, %v526
    %v556 = vpack.c.b16 %v527, %v527
    %v557 = vpack.c.b16 %v528, %v528
    %v558 = vpack.c.b16 %v529, %v529
    %v559 = vpack.c.b16 %v530, %v530
    %v560 = vpack.c.b16 %v531, %v531
    %v561 = vpack.c.b16 %v532, %v532
    %v562 = vpack.c.b16 %v533, %v533
    %v563 = vpack.c.b16 %v534, %v534
    %v564 = vpack.c.b16 %v535, %v535
    %v565 = vpack.c.b16 %v536, %v536
    %v566 = vpack.c.b16 %v537, %v537
    %v567 = vpack.c.b16 %v538, %v538
    %v568 = vpack.c.b16 %v539, %v539
    %v569 = vpack.c.b16 %v540, %v540
    %v570 = vpack.c.b16 %v541, %v541
    %v571 = vpack.c.b16 %v542, %v542
    %v572 = vpack.c.b16 %v543, %v543
    %v573 = vpack.c.b16 %v544, %v544
    %v574 = vpack.c.b16 %v545, %v545
    %v575 = vpack.c.b16 %v546, %v546
    %v576 = vpack.c.b16 %v547, %v547
    %v577 = vpack.c.b16 %v548, %v548
    %v578 = vpack.c.b16 %v549, %v549
    %v579 = vpack.c.b16 %v550, %v550
    %v580 = vpack.c.b16 %v551, %v551
    %v1074 = vunpack.c.l.b16 %v37
    %v1075 = vunpack.c.l.b16 %v38
    %v1076 = vunpack.c.l.b16 %v39
    %v1077 = vunpack.c.l.b16 %v40
    %v1078 = vunpack.c.l.b16 %v41
    %v1079 = vunpack.c.l.b16 %v42
    %v1080 = vunpack.c.l.b16 %v43
    %v1081 = vunpack.c.l.b16 %v44
    %v1082 = vunpack.c.l.b16 %v45
    %v1083 = vunpack.c.l.b16 %v46
    %v1084 = vunpack.c.l.b16 %v47
    %v1085 = vunpack.c.l.b16 %v48
    %v1086 = vunpack.c.l.b16 %v49
    %v1087 = vunpack.c.l.b16 %v50
    %v1088 = vunpack.c.l.b16 %v51
    %v1089 = vunpack.c.l.b16 %v52
    %v1090 = vunpack.c.l.b16 %v53
    %v1091 = vunpack.c.l.b16 %v54
    %v1092 = vunpack.c.l.b16 %v55
    %v1093 = vunpack.c.l.b16 %v56
    %v1094 = vunpack.c.l.b16 %v57
    %v1095 = vunpack.c.l.b16 %v58
    %v1096 = vunpack.c.l.b16 %v59
    %v1097 = vunpack.c.l.b16 %v60
    %v1098 = vunpack.c.l.b16 %v61
    %v1099 = vunpack.c.l.b16 %v62
    %v1100 = vunpack.c.l.b16 %v63
    %v1101 = vunpack.c.l.b16 %v64
    %v1102 = vunpack.c.l.b16 %v65
    %v1103 = vunpack.c.l.b16 %v66
    %v1104 = vunpack.c.l.b16 %v67
    %v1105 = vunpack.c.l.b16 %v68
    %v1106 = vunpack.c.l.b16 %v69
    %v1107 = vunpack.c.l.b16 %v70
    %v1108 = vunpack.c.l.b16 %v71
    %v1109 = vunpack.c.l.b16 %v72
    %v1110 = vunpack.c.l.b16 %v73
    %v1111 = vunpack.c.l.b16 %v74
    %v1112 = vunpack.c.l.b16 %v75
    %v1113 = vunpack.c.l.b16 %v76
    %v1114 = vunpack.c.l.b16 %v77
    %v1115 = vunpack.c.l.b16 %v78
    %v1116 = vunpack.c.l.b16 %v79
    %v1117 = vunpack.c.l.b16 %v80
    %v1118 = vunpack.c.l.b16 %v81
    %v1119 = vunpack.c.l.b16 %v82
    %v1120 = vunpack.c.l.b16 %v83
    %v1121 = vunpack.c.l.b16 %v84
    %v1122 = vunpack.c.l.b16 %v85
    %v1123 = vunpack.c.l.b16 %v86
    %v1124 = vunpack.c.l.b16 %v87
    %v1125 = vunpack.c.l.b16 %v88
    %v1126 = vunpack.c.l.b16 %v89
    %v1127 = vunpack.c.l.b16 %v90
    %v1128 = vunpack.c.l.b16 %v91
    %v1129 = vunpack.c.l.b16 %v92
    %v1130 = vunpack.c.l.b16 %v93
    %v1131 = vunpack.c.l.b16 %v94
    %v1132 = vunpack.c.l.b16 %v95
    %v1133 = vunpack.c.l.b16 %v96
    %v1134 = vunpack.c.l.b16 %v97
    %v1135 = vunpack.c.l.b16 %v98
    %v1136 = vunpack.c.l.b16 %v99
    %v1137 = vunpack.c.l.b16 %v100
    %v1138 = vunpack.c.l.b16 %v101
    %v1139 = vunpack.c.l.b16 %v102
    %v1140 = vunpack.c.l.b16 %v103
    %v1141 = vunpack.c.l.b16 %v104
    %v1142 = vunpack.c.l.b16 %v105
    %v1143 = vunpack.c.l.b16 %v106
    %v1144 = vunpack.c.l.b16 %v107
    %v1145 = vunpack.c.l.b16 %v108
    %v1146 = vunpack.c.l.b16 %v109
    %v1147 = vunpack.c.l.b16 %v110
    %v1148 = vunpack.c.l.b16 %v111
    %v1149 = vunpack.c.l.b16 %v112
    %v1150 = vunpack.c.l.b16 %v113
    %v1151 = vunpack.c.l.b16 %v114
    %v1152 = vunpack.c.l.b16 %v115
    %v1153 = vunpack.c.l.b16 %v116
    %v1154 = vunpack.c.l.b16 %v117
    %v1155 = vunpack.c.l.b16 %v118
    %v1156 = vunpack.c.l.b16 %v119
    %v1157 = vunpack.c.l.b16 %v120
    %v1158 = vunpack.c.l.b16 %v121
    %v1159 = vunpack.c.l.b16 %v122
    %v1160 = vunpack.c.l.b16 %v123
    %v1161 = vunpack.c.l.b16 %v124
    %v1162 = vunpack.c.l.b16 %v125
    %v1163 = vunpack.c.l.b16 %v126
    %v1164 = vunpack.c.l.b16 %v127
    %v1165 = vunpack.c.l.b16 %v128
    %v1166 = vunpack.c.l.b16 %v129
    %v1167 = vunpack.c.l.b16 %v130
    %v1168 = vunpack.c.l.b16 %v131
    %v1169 = vunpack.c.l.b16 %v132
    %v1170 = vunpack.c.l.b16 %v133
    %v1171 = vunpack.c.l.b16 %v134
    %v1172 = vunpack.c.l.b16 %v135
    %v1173 = vunpack.c.l.b16 %v136
    %v1174 = vunpack.c.l.b16 %v137
    %v1175 = vunpack.c.l.b16 %v138
    %v1176 = vunpack.c.l.b16 %v139
    %v1177 = vunpack.c.l.b16 %v140
    %v1178 = vunpack.c.l.b16 %v141
    %v1179 = vunpack.c.l.b16 %v142
    %v1180 = vunpack.c.l.b16 %v143
    %v1181 = vunpack.c.l.b16 %v144
    %v1182 = vunpack.c.l.b16 %v145
    %v1183 = vunpack.c.l.b16 %v146
    %v1184 = vunpack.c.l.b16 %v147
    %v1185 = vunpack.c.l.b16 %v148
    %v1186 = vunpack.c.l.b16 %v149
    %v1187 = vunpack.c.l.b16 %v150
    %v1188 = vunpack.c.l.b16 %v151
    %v1189 = vunpack.c.l.b16 %v152
    %v1190 = vunpack.c.l.b16 %v153
    %v1191 = vunpack.c.l.b16 %v154
    %v1192 = vunpack.c.l.b16 %v155
    %v1193 = vunpack.c.l.b16 %v156
    %v1194 = vunpack.c.l.b16 %v157
    %v1195 = vunpack.c.l.b16 %v158
    %v1196 = vunpack.c.l.b16 %v159
    %v1197 = vunpack.c.l.b16 %v160
    %v1198 = vunpack.c.l.b16 %v161
    %v1199 = vunpack.c.l.b16 %v162
    %v1200 = vunpack.c.l.b16 %v163
    %v1201 = vunpack.c.l.b16 %v164
    %v1202 = vunpack.c.l.b16 %v165
    %v1203 = vunpack.c.l.b16 %v166
    %v1204 = vunpack.c.l.b16 %v167
    %v1205 = vunpack.c.l.b16 %v168
    %v1206 = vunpack.c.l.b16 %v169
    %v1207 = vunpack.c.l.b16 %v170
    %v1208 = vunpack.c.l.b16 %v171
    %v1209 = vunpack.c.l.b16 %v172
    %v1210 = vunpack.c.l.b16 %v173
    %v1211 = vunpack.c.l.b16 %v174
    %v1212 = vunpack.c.l.b16 %v175
    %v1213 = vunpack.c.l.b16 %v176
    %v1214 = vunpack.c.l.b16 %v177
    %v1215 = vunpack.c.l.b16 %v178
    %v1216 = vunpack.c.l.b16 %v179
    %v1217 = vunpack.c.l.b16 %v180
    %v1218 = vunpack.c.l.b16 %v181
    %v1219 = vunpack.c.l.b16 %v182
    %v1220 = vunpack.c.l.b16 %v183
    %v1221 = vunpack.c.l.b16 %v184
    %v1222 = vunpack.c.l.b16 %v185
    %v1223 = vunpack.c.l.b16 %v186
    %v1224 = vunpack.c.l.b16 %v187
    %v1225 = vunpack.c.l.b16 %v188
    %v1226 = vunpack.c.l.b16 %v189
    %v1227 = vunpack.c.l.b16 %v190
    %v1228 = vunpack.c.l.b16 %v191
    %v1229 = vunpack.c.l.b16 %v192
    %v1230 = vunpack.c.l.b16 %v193
    %v1231 = vunpack.c.l.b16 %v194
    %v1232 = vunpack.c.l.b16 %v195
    %v1233 = vunpack.c.l.b16 %v196
    %v1234 = vunpack.c.l.b16 %v197
    %v1235 = vunpack.c.l.b16 %v198
    %v1236 = vunpack.c.l.b16 %v199
    %v1237 = vunpack.c.l.b16 %v200
    %v1238 = vunpack.c.l.b16 %v201
    %v1239 = vunpack.c.l.b16 %v202
    %v1240 = vunpack.c.l.b16 %v203
    %v1241 = vunpack.c.l.b16 %v204
    %v1242 = vunpack.c.l.b16 %v205
    %v1243 = vunpack.c.l.b16 %v206
    %v1244 = vunpack.c.l.b16 %v207
    %v1245 = vunpack.c.l.b16 %v208
    %v1246 = vunpack.c.l.b16 %v209
    %v1247 = vunpack.c.l.b16 %v210
    %v1248 = vunpack.c.l.b16 %v211
    %v1249 = vunpack.c.l.b16 %v212
    %v1250 = vunpack.c.l.b16 %v213
    %v1251 = vunpack.c.l.b16 %v214
    %v1252 = vunpack.c.l.b16 %v215
    %v1253 = vunpack.c.l.b16 %v216
    %v1254 = vunpack.c.l.b16 %v217
    %v1255 = vunpack.c.l.b16 %v218
    %v1256 = vunpack.c.l.b16 %v219
    %v1257 = vunpack.c.l.b16 %v220
    %v1258 = vunpack.c.l.b16 %v221
    %v1259 = vunpack.c.l.b16 %v222
    %v1260 = vunpack.c.l.b16 %v223
    %v1261 = vunpack.c.l.b16 %v224
    %v1262 = vunpack.c.l.b16 %v225
    %v1263 = vunpack.c.l.b16 %v226
    %v1264 = vunpack.c.l.b16 %v227
    %v1265 = vunpack.c.l.b16 %v228
    %v1266 = vunpack.c.l.b16 %v229
    %v1267 = vunpack.c.l.b16 %v230
    %v1268 = vunpack.c.l.b16 %v231
    %v1269 = vunpack.c.l.b16 %v232
    %v1270 = vunpack.c.l.b16 %v233
    %v1271 = vunpack.c.l.b16 %v234
    %v1272 = vunpack.c.l.b16 %v235
    %v1273 = vunpack.c.l.b16 %v236
    %v1274 = vunpack.c.l.b16 %v237
    %v1275 = vunpack.c.l.b16 %v238
    %v1276 = vunpack.c.l.b16 %v239
    %v1277 = vunpack.c.l.b16 %v240
    %v1278 = vunpack.c.l.b16 %v241
    %v1279 = vunpack.c.l.b16 %v242
    %v1280 = vunpack.c.l.b16 %v243
    %v1281 = vunpack.c.l.b16 %v244
    %v1282 = vunpack.c.l.b16 %v245
    %v1283 = vunpack.c.l.b16 %v246
    %v1284 = vunpack.c.l.b16 %v247
    %v1285 = vunpack.c.l.b16 %v248
    %v1286 = vunpack.c.l.b16 %v249
    %v1287 = vunpack.c.l.b16 %v250
    %v1288 = vunpack.c.l.b16 %v251
    %v1289 = vunpack.c.l.b16 %v252
    %v1290 = vunpack.c.l.b16 %v253
    %v1291 = vunpack.c.l.b16 %v254
    %v1292 = vunpack.c.l.b16 %v255
    %v1293 = vunpack.c.l.b16 %v256
    %v1294 = vunpack.c.l.b16 %v257
    %v1295 = vunpack.c.l.b16 %v258
    %v1296 = vunpack.c.l.b16 %v259
    %v1297 = vunpack.c.l.b16 %v260
    %v1298 = vunpack.c.l.b16 %v261
    %v1299 = vunpack.c.l.b16 %v262
    %v1300 = vunpack.c.l.b16 %v263
    %v1301 = vunpack.c.l.b16 %v264
    %v1302 = vunpack.c.l.b16 %v265
    %v1303 = vunpack.c.l.b16 %v266
    %v1304 = vunpack.c.l.b16 %v267
    %v1305 = vunpack.c.l.b16 %v268
    %v1306 = vunpack.c.l.b16 %v269
    %v1307 = vunpack.c.l.b16 %v270
    %v1308 = vunpack.c.l.b16 %v271
    %v1309 = vunpack.c.l.b16 %v272
    %v1310 = vunpack.c.l.b16 %v273
    %v1311 = vunpack.c.l.b16 %v274
    %v1312 = vunpack.c.l.b16 %v275
    %v1313 = vunpack.c.l.b16 %v276
    %v1314 = vunpack.c.l.b16 %v277
    %v1315 = vunpack.c.l.b16 %v278
    %v1316 = vunpack.c.l.b16 %v279
    %v1317 = vunpack.c.l.b16 %v280
    %v1318 = vunpack.c.l.b16 %v281
    %v1319 = vunpack.c.l.b16 %v282
    %v1320 = vunpack.c.l.b16 %v283
    %v1321 = vunpack.c.l.b16 %v284
    %v1322 = vunpack.c.l.b16 %v285
    %v1323 = vunpack.c.l.b16 %v286
    %v1324 = vunpack.c.l.b16 %v287
    %v1325 = vunpack.c.l.b16 %v288
    %v1326 = vunpack.c.l.b16 %v289
    %v1327 = vunpack.c.l.b16 %v290
    %v1328 = vunpack.c.l.b16 %v291
    %v1329 = vunpack.c.l.b16 %v292
    %v1330 = vunpack.c.l.b16 %v293
    %v1331 = vunpack.c.l.b16 %v294
    %v1332 = vunpack.c.l.b16 %v295
    %v1333 = vunpack.c.l.b16 %v296
    %v1334 = vunpack.c.l.b16 %v297
    %v1335 = vunpack.c.l.b16 %v298
    %v1336 = vunpack.c.l.b16 %v299
    %v1337 = vunpack.c.l.b16 %v300
    %v1338 = vunpack.c.l.b16 %v301
    %v1339 = vunpack.c.l.b16 %v302
    %v1340 = vunpack.c.l.b16 %v303
    %v1341 = vunpack.c.l.b16 %v304
    %v1342 = vunpack.c.l.b16 %v305
    %v1343 = vunpack.c.l.b16 %v306
    %v1344 = vunpack.c.l.b16 %v307
    %v1345 = vunpack.c.l.b16 %v308
    %v1346 = vunpack.c.l.b16 %v309
    %v1347 = vunpack.c.l.b16 %v310
    %v1348 = vunpack.c.l.b16 %v311
    %v1349 = vunpack.c.l.b16 %v312
    %v1350 = vunpack.c.l.b16 %v313
    %v1351 = vunpack.c.l.b16 %v314
    %v1352 = vunpack.c.l.b16 %v315
    %v1353 = vunpack.c.l.b16 %v316
    %v1354 = vunpack.c.l.b16 %v317
    %v1355 = vunpack.c.l.b16 %v318
    %v1356 = vunpack.c.l.b16 %v319
    %v1357 = vunpack.c.l.b16 %v320
    %v1358 = vunpack.c.l.b16 %v321
    %v1359 = vunpack.c.l.b16 %v322
    %v1360 = vunpack.c.l.b16 %v323
    %v1361 = vunpack.c.l.b16 %v324
    %v1362 = vunpack.c.l.b16 %v325
    %v1363 = vunpack.c.l.b16 %v326
    %v1364 = vunpack.c.l.b16 %v327
    %v1365 = vunpack.c.l.b16 %v328
    %v1366 = vunpack.c.l.b16 %v329
    %v1367 = vunpack.c.l.b16 %v330
    %v1368 = vunpack.c.l.b16 %v331
    %v1369 = vunpack.c.l.b16 %v332
    %v1370 = vunpack.c.l.b16 %v333
    %v1371 = vunpack.c.l.b16 %v334
    %v1372 = vunpack.c.l.b16 %v335
    %v1373 = vunpack.c.l.b16 %v336
    %v1374 = vunpack.c.l.b16 %v337
    %v1375 = vunpack.c.l.b16 %v338
    %v1376 = vunpack.c.l.b16 %v339
    %v1377 = vunpack.c.l.b16 %v340
    %v1378 = vunpack.c.l.b16 %v341
    %v1379 = vunpack.c.l.b16 %v342
    %v1380 = vunpack.c.l.b16 %v343
    %v1381 = vunpack.c.l.b16 %v344
    %v1382 = vunpack.c.l.b16 %v345
    %v1383 = vunpack.c.l.b16 %v346
    %v1384 = vunpack.c.l.b16 %v347
    %v1385 = vunpack.c.l.b16 %v348
    %v1386 = vunpack.c.l.b16 %v349
    %v1387 = vunpack.c.l.b16 %v350
    %v1388 = vunpack.c.l.b16 %v351
    %v1389 = vunpack.c.l.b16 %v352
    %v1390 = vunpack.c.l.b16 %v353
    %v1391 = vunpack.c.l.b16 %v354
    %v1392 = vunpack.c.l.b16 %v355
    %v1393 = vunpack.c.l.b16 %v356
    %v1394 = vunpack.c.l.b16 %v357
    %v1395 = vunpack.c.l.b16 %v358
    %v1396 = vunpack.c.l.b16 %v359
    %v1397 = vunpack.c.l.b16 %v360
    %v1398 = vunpack.c.l.b16 %v361
    %v1399 = vunpack.c.l.b16 %v362
    %v1400 = vunpack.c.l.b16 %v363
    %v1401 = vunpack.c.l.b16 %v364
    %v1402 = vunpack.c.l.b16 %v365
    %v1403 = vunpack.c.l.b16 %v366
    %v1404 = vunpack.c.l.b16 %v367
    %v1405 = vunpack.c.l.b16 %v368
    %v1406 = vunpack.c.l.b16 %v369
    %v1407 = vunpack.c.l.b16 %v370
    %v1408 = vunpack.c.l.b16 %v371
    %v1409 = vunpack.c.l.b16 %v372
    %v1410 = vunpack.c.l.b16 %v373
    %v1411 = vunpack.c.l.b16 %v374
    %v1412 = vunpack.c.l.b16 %v375
    %v1413 = vunpack.c.l.b16 %v376
    %v1414 = vunpack.c.l.b16 %v377
    %v1415 = vunpack.c.l.b16 %v378
    %v1416 = vunpack.c.l.b16 %v379
    %v1417 = vunpack.c.l.b16 %v380
    %v1418 = vunpack.c.l.b16 %v381
    %v1419 = vunpack.c.l.b16 %v382
    %v1420 = vunpack.c.l.b16 %v383
    %v1421 = vunpack.c.l.b16 %v384
    %v1422 = vunpack.c.l.b16 %v385
    %v1423 = vunpack.c.l.b16 %v386
    %v1424 = vunpack.c.l.b16 %v387
    %v1425 = vunpack.c.l.b16 %v388
    %v1426 = vunpack.c.l.b16 %v389
    %v1427 = vunpack.c.l.b16 %v390
    %v1428 = vunpack.c.l.b16 %v391
    %v1429 = vunpack.c.l.b16 %v392
    %v1430 = vunpack.c.l.b16 %v393
    %v1431 = vunpack.c.l.b16 %v394
    %v1432 = vunpack.c.l.b16 %v395
    %v1433 = vunpack.c.l.b16 %v396
    %v1434 = vunpack.c.l.b16 %v397
    %v1435 = vunpack.c.l.b16 %v398
    %v1436 = vunpack.c.l.b16 %v399
    %v1437 = vunpack.c.l.b16 %v400
    %v1438 = vunpack.c.l.b16 %v401
    %v1439 = vunpack.c.l.b16 %v402
    %v1440 = vunpack.c.l.b16 %v403
    %v1441 = vunpack.c.l.b16 %v404
    %v1442 = vunpack.c.l.b16 %v405
    %v1443 = vunpack.c.l.b16 %v406
    %v1444 = vunpack.c.l.b16 %v407
    %v1445 = vunpack.c.l.b16 %v408
    %v1446 = vunpack.c.l.b16 %v409
    %v1447 = vunpack.c.l.b16 %v410
    %v1448 = vunpack.c.l.b16 %v411
    %v1449 = vunpack.c.l.b16 %v412
    %v1450 = vunpack.c.l.b16 %v413
    %v1451 = vunpack.c.l.b16 %v414
    %v1452 = vunpack.c.l.b16 %v415
    %v1453 = vunpack.c.l.b16 %v416
    %v1454 = vunpack.c.l.b16 %v417
    %v1455 = vunpack.c.l.b16 %v418
    %v1456 = vunpack.c.l.b16 %v419
    %v1457 = vunpack.c.l.b16 %v420
    %v1458 = vunpack.c.l.b16 %v421
    %v1459 = vunpack.c.l.b16 %v422
    %v1460 = vunpack.c.l.b16 %v423
    %v1461 = vunpack.c.l.b16 %v424
    %v1462 = vunpack.c.l.b16 %v425
    %v1463 = vunpack.c.l.b16 %v426
    %v1464 = vunpack.c.l.b16 %v427
    %v1465 = vunpack.c.l.b16 %v428
    %v1466 = vunpack.c.l.b16 %v429
    %v1467 = vunpack.c.l.b16 %v430
    %v1468 = vunpack.c.l.b16 %v431
    %v1469 = vunpack.c.l.b16 %v432
    %v1470 = vunpack.c.l.b16 %v433
    %v1471 = vunpack.c.l.b16 %v434
    %v1472 = vunpack.c.l.b16 %v435
    %v1473 = vunpack.c.l.b16 %v436
    %v1474 = vunpack.c.l.b16 %v437
    %v1475 = vunpack.c.l.b16 %v438
    %v1476 = vunpack.c.l.b16 %v439
    %v1477 = vunpack.c.l.b16 %v440
    %v1478 = vunpack.c.l.b16 %v441
    %v1479 = vunpack.c.l.b16 %v442
    %v1480 = vunpack.c.l.b16 %v443
    %v1481 = vunpack.c.l.b16 %v444
    %v1482 = vunpack.c.l.b16 %v445
    %v1483 = vunpack.c.l.b16 %v446
    %v1484 = vunpack.c.l.b16 %v447
    %v1485 = vunpack.c.l.b16 %v448
    %v1486 = vunpack.c.l.b16 %v449
    %v1487 = vunpack.c.l.b16 %v450
    %v1488 = vunpack.c.l.b16 %v451
    %v1489 = vunpack.c.l.b16 %v452
    %v1490 = vunpack.c.l.b16 %v453
    %v1491 = vunpack.c.l.b16 %v454
    %v1492 = vunpack.c.l.b16 %v455
    %v1493 = vunpack.c.l.b16 %v456
    %v1494 = vunpack.c.l.b16 %v457
    %v1495 = vunpack.c.l.b16 %v458
    %v1496 = vunpack.c.l.b16 %v459
    %v1497 = vunpack.c.l.b16 %v460
    %v1498 = vunpack.c.l.b16 %v461
    %v1499 = vunpack.c.l.b16 %v462
    %v1500 = vunpack.c.l.b16 %v463
    %v1501 = vunpack.c.l.b16 %v464
    %v1502 = vunpack.c.l.b16 %v465
    %v1503 = vunpack.c.l.b16 %v466
    %v1504 = vunpack.c.l.b16 %v467
    %v1505 = vunpack.c.l.b16 %v468
    %v1506 = vunpack.c.l.b16 %v469
    %v1507 = vunpack.c.l.b16 %v470
    %v1508 = vunpack.c.l.b16 %v471
    %v1509 = vunpack.c.l.b16 %v472
    %v1510 = vunpack.c.l.b16 %v473
    %v1511 = vunpack.c.l.b16 %v474
    %v1512 = vunpack.c.l.b16 %v475
    %v1513 = vunpack.c.l.b16 %v476
    %v1514 = vunpack.c.l.b16 %v477
    %v1515 = vunpack.c.l.b16 %v478
    %v1516 = vunpack.c.l.b16 %v479
    %v1517 = vunpack.c.l.b16 %v480
    %v1518 = vunpack.c.l.b16 %v481
    %v1519 = vunpack.c.l.b16 %v482
    %v1520 = vunpack.c.l.b16 %v483
    %v1521 = vunpack.c.l.b16 %v484
    %v1522 = vunpack.c.l.b16 %v485
    %v1523 = vunpack.c.l.b16 %v486
    %v1524 = vunpack.c.l.b16 %v487
    %v1525 = vunpack.c.l.b16 %v488
    %v1526 = vunpack.c.l.b16 %v489
    %v1527 = vunpack.c.l.b16 %v490
    %v1528 = vunpack.c.l.b16 %v491
    %v1529 = vunpack.c.l.b16 %v492
    %v1530 = vunpack.c.l.b16 %v493
    %v1531 = vunpack.c.l.b16 %v494
    %v1532 = vunpack.c.l.b16 %v495
    %v1533 = vunpack.c.l.b16 %v496
    %v1534 = vunpack.c.l.b16 %v497
    %v1535 = vunpack.c.l.b16 %v498
    %v1536 = vunpack.c.l.b16 %v499
    %v1537 = vunpack.c.l.b16 %v500
    %v1538 = vpack.c.b16 %v1075, %v1074
    %v1539 = vpack.c.b16 %v1077, %v1076
    %v1540 = vpack.c.b16 %v1079, %v1078
    %v1541 = vpack.c.b16 %v1081, %v1080
    %v1542 = vpack.c.b16 %v1083, %v1082
    %v1543 = vpack.c.b16 %v1085, %v1084
    %v1544 = vpack.c.b16 %v1087, %v1086
    %v1545 = vpack.c.b16 %v1089, %v1088
    %v1546 = vpack.c.b16 %v1091, %v1090
    %v1547 = vpack.c.b16 %v1093, %v1092
    %v1548 = vpack.c.b16 %v1095, %v1094
    %v1549 = vpack.c.b16 %v1097, %v1096
    %v1550 = vpack.c.b16 %v1099, %v1098
    %v1551 = vpack.c.b16 %v1101, %v1100
    %v1552 = vpack.c.b16 %v1103, %v1102
    %v1553 = vpack.c.b16 %v1105, %v1104
    %v1554 = vpack.c.b16 %v1107, %v1106
    %v1555 = vpack.c.b16 %v1109, %v1108
    %v1556 = vpack.c.b16 %v1111, %v1110
    %v1557 = vpack.c.b16 %v1113, %v1112
    %v1558 = vpack.c.b16 %v1115, %v1114
    %v1559 = vpack.c.b16 %v1117, %v1116
    %v1560 = vpack.c.b16 %v1119, %v1118
    %v1561 = vpack.c.b16 %v1121, %v1120
    %v1562 = vpack.c.b16 %v1123, %v1122
    %v1563 = vpack.c.b16 %v1125, %v1124
    %v1564 = vpack.c.b16 %v1127, %v1126
    %v1565 = vpack.c.b16 %v1129, %v1128
    %v1566 = vpack.c.b16 %v1131, %v1130
    %v1567 = vpack.c.b16 %v1133, %v1132
    %v1568 = vpack.c.b16 %v1135, %v1134
    %v1569 = vpack.c.b16 %v1137, %v1136
    %v1570 = vpack.c.b16 %v1139, %v1138
    %v1571 = vpack.c.b16 %v1141, %v1140
    %v1572 = vpack.c.b16 %v1143, %v1142
    %v1573 = vpack.c.b16 %v1145, %v1144
    %v1574 = vpack.c.b16 %v1147, %v1146
    %v1575 = vpack.c.b16 %v1149, %v1148
    %v1576 = vpack.c.b16 %v1151, %v1150
    %v1577 = vpack.c.b16 %v1153, %v1152
    %v1578 = vpack.c.b16 %v1155, %v1154
    %v1579 = vpack.c.b16 %v1157, %v1156
    %v1580 = vpack.c.b16 %v1159, %v1158
    %v1581 = vpack.c.b16 %v1161, %v1160
    %v1582 = vpack.c.b16 %v1163, %v1162
    %v1583 = vpack.c.b16 %v1165, %v1164
    %v1584 = vpack.c.b16 %v1167, %v1166
    %v1585 = vpack.c.b16 %v1169, %v1168
    %v1586 = vpack.c.b16 %v1171, %v1170
    %v1587 = vpack.c.b16 %v1173, %v1172
    %v1588 = vpack.c.b16 %v1175, %v1174
    %v1589 = vpack.c.b16 %v1177, %v1176
    %v1590 = vpack.c.b16 %v1179, %v1178
    %v1591 = vpack.c.b16 %v1181, %v1180
    %v1592 = vpack.c.b16 %v1183, %v1182
    %v1593 = vpack.c.b16 %v1185, %v1184
    %v1594 = vpack.c.b16 %v1187, %v1186
    %v1595 = vpack.c.b16 %v1189, %v1188
    %v1596 = vpack.c.b16 %v1191, %v1190
    %v1597 = vpack.c.b16 %v1193, %v1192
    %v1598 = vpack.c.b16 %v1195, %v1194
    %v1599 = vpack.c.b16 %v1197, %v1196
    %v1600 = vpack.c.b16 %v1199, %v1198
    %v1601 = vpack.c.b16 %v1201, %v1200
    %v1602 = vpack.c.b16 %v1203, %v1202
    %v1603 = vpack.c.b16 %v1205, %v1204
    %v1604 = vpack.c.b16 %v1207, %v1206
    %v1605 = vpack.c.b16 %v1209, %v1208
    %v1606 = vpack.c.b16 %v1211, %v1210
    %v1607 = vpack.c.b16 %v1213, %v1212
    %v1608 = vpack.c.b16 %v1215, %v1214
    %v1609 = vpack.c.b16 %v1217, %v1216
    %v1610 = vpack.c.b16 %v1219, %v1218
    %v1611 = vpack.c.b16 %v1221, %v1220
    %v1612 = vpack.c.b16 %v1223, %v1222
    %v1613 = vpack.c.b16 %v1225, %v1224
    %v1614 = vpack.c.b16 %v1227, %v1226
    %v1615 = vpack.c.b16 %v1229, %v1228
    %v1616 = vpack.c.b16 %v1231, %v1230
    %v1617 = vpack.c.b16 %v1233, %v1232
    %v1618 = vpack.c.b16 %v1235, %v1234
    %v1619 = vpack.c.b16 %v1237, %v1236
    %v1620 = vpack.c.b16 %v1239, %v1238
    %v1621 = vpack.c.b16 %v1241, %v1240
    %v1622 = vpack.c.b16 %v1243, %v1242
    %v1623 = vpack.c.b16 %v1245, %v1244
    %v1624 = vpack.c.b16 %v1247, %v1246
    %v1625 = vpack.c.b16 %v1249, %v1248
    %v1626 = vpack.c.b16 %v1251, %v1250
    %v1627 = vpack.c.b16 %v1253, %v1252
    %v1628 = vpack.c.b16 %v1255, %v1254
    %v1629 = vpack.c.b16 %v1257, %v1256
    %v1630 = vpack.c.b16 %v1259, %v1258
    %v1631 = vpack.c.b16 %v1261, %v1260
    %v1632 = vpack.c.b16 %v1263, %v1262
    %v1633 = vpack.c.b16 %v1265, %v1264
    %v1634 = vpack.c.b16 %v1267, %v1266
    %v1635 = vpack.c.b16 %v1269, %v1268
    %v1636 = vpack.c.b16 %v1271, %v1270
    %v1637 = vpack.c.b16 %v1273, %v1272
    %v1638 = vpack.c.b16 %v1275, %v1274
    %v1639 = vpack.c.b16 %v1277, %v1276
    %v1640 = vpack.c.b16 %v1279, %v1278
    %v1641 = vpack.c.b16 %v1281, %v1280
    %v1642 = vpack.c.b16 %v1283, %v1282
    %v1643 = vpack.c.b16 %v1285, %v1284
    %v1644 = vpack.c.b16 %v1287, %v1286
    %v1645 = vpack.c.b16 %v1289, %v1288
    %v1646 = vpack.c.b16 %v1291, %v1290
    %v1647 = vpack.c.b16 %v1293, %v1292
    %v1648 = vpack.c.b16 %v1295, %v1294
    %v1649 = vpack.c.b16 %v1297, %v1296
    %v1650 = vpack.c.b16 %v1299, %v1298
    %v1651 = vpack.c.b16 %v1301, %v1300
    %v1652 = vpack.c.b16 %v1303, %v1302
    %v1653 = vpack.c.b16 %v1305, %v1304
    %v1654 = vpack.c.b16 %v1307, %v1306
    %v1655 = vpack.c.b16 %v1309, %v1308
    %v1656 = vpack.c.b16 %v1311, %v1310
    %v1657 = vpack.c.b16 %v1313, %v1312
    %v1658 = vpack.c.b16 %v1315, %v1314
    %v1659 = vpack.c.b16 %v1317, %v1316
    %v1660 = vpack.c.b16 %v1319, %v1318
    %v1661 = vpack.c.b16 %v1321, %v1320
    %v1662 = vpack.c.b16 %v1323, %v1322
    %v1663 = vpack.c.b16 %v1325, %v1324
    %v1664 = vpack.c.b16 %v1327, %v1326
    %v1665 = vpack.c.b16 %v1329, %v1328
    %v1666 = vpack.c.b16 %v1331, %v1330
    %v1667 = vpack.c.b16 %v1333, %v1332
    %v1668 = vpack.c.b16 %v1335, %v1334
    %v1669 = vpack.c.b16 %v1337, %v1336
    %v1670 = vpack.c.b16 %v1339, %v1338
    %v1671 = vpack.c.b16 %v1341, %v1340
    %v1672 = vpack.c.b16 %v1343, %v1342
    %v1673 = vpack.c.b16 %v1345, %v1344
    %v1674 = vpack.c.b16 %v1347, %v1346
    %v1675 = vpack.c.b16 %v1349, %v1348
    %v1676 = vpack.c.b16 %v1351, %v1350
    %v1677 = vpack.c.b16 %v1353, %v1352
    %v1678 = vpack.c.b16 %v1355, %v1354
    %v1679 = vpack.c.b16 %v1357, %v1356
    %v1680 = vpack.c.b16 %v1359, %v1358
    %v1681 = vpack.c.b16 %v1361, %v1360
    %v1682 = vpack.c.b16 %v1363, %v1362
    %v1683 = vpack.c.b16 %v1365, %v1364
    %v1684 = vpack.c.b16 %v1367, %v1366
    %v1685 = vpack.c.b16 %v1369, %v1368
    %v1686 = vpack.c.b16 %v1371, %v1370
    %v1687 = vpack.c.b16 %v1373, %v1372
    %v1688 = vpack.c.b16 %v1375, %v1374
    %v1689 = vpack.c.b16 %v1377, %v1376
    %v1690 = vpack.c.b16 %v1379, %v1378
    %v1691 = vpack.c.b16 %v1381, %v1380
    %v1692 = vpack.c.b16 %v1383, %v1382
    %v1693 = vpack.c.b16 %v1385, %v1384
    %v1694 = vpack.c.b16 %v1387, %v1386
    %v1695 = vpack.c.b16 %v1389, %v1388
    %v1696 = vpack.c.b16 %v1391, %v1390
    %v1697 = vpack.c.b16 %v1393, %v1392
    %v1698 = vpack.c.b16 %v1395, %v1394
    %v1699 = vpack.c.b16 %v1397, %v1396
    %v1700 = vpack.c.b16 %v1399, %v1398
    %v1701 = vpack.c.b16 %v1401, %v1400
    %v1702 = vpack.c.b16 %v1403, %v1402
    %v1703 = vpack.c.b16 %v1405, %v1404
    %v1704 = vpack.c.b16 %v1407, %v1406
    %v1705 = vpack.c.b16 %v1409, %v1408
    %v1706 = vpack.c.b16 %v1411, %v1410
    %v1707 = vpack.c.b16 %v1413, %v1412
    %v1708 = vpack.c.b16 %v1415, %v1414
    %v1709 = vpack.c.b16 %v1417, %v1416
    %v1710 = vpack.c.b16 %v1419, %v1418
    %v1711 = vpack.c.b16 %v1421, %v1420
    %v1712 = vpack.c.b16 %v1423, %v1422
    %v1713 = vpack.c.b16 %v1425, %v1424
    %v1714 = vpack.c.b16 %v1427, %v1426
    %v1715 = vpack.c.b16 %v1429, %v1428
    %v1716 = vpack.c.b16 %v1431, %v1430
    %v1717 = vpack.c.b16 %v1433, %v1432
    %v1718 = vpack.c.b16 %v1435, %v1434
    %v1719 = vpack.c.b16 %v1437, %v1436
    %v1720 = vpack.c.b16 %v1439, %v1438
    %v1721 = vpack.c.b16 %v1441, %v1440
    %v1722 = vpack.c.b16 %v1443, %v1442
    %v1723 = vpack.c.b16 %v1445, %v1444
    %v1724 = vpack.c.b16 %v1447, %v1446
    %v1725 = vpack.c.b16 %v1449, %v1448
    %v1726 = vpack.c.b16 %v1451, %v1450
    %v1727 = vpack.c.b16 %v1453, %v1452
    %v1728 = vpack.c.b16 %v1455, %v1454
    %v1729 = vpack.c.b16 %v1457, %v1456
    %v1730 = vpack.c.b16 %v1459, %v1458
    %v1731 = vpack.c.b16 %v1461, %v1460
    %v1732 = vpack.c.b16 %v1463, %v1462
    %v1733 = vpack.c.b16 %v1465, %v1464
    %v1734 = vpack.c.b16 %v1467, %v1466
    %v1735 = vpack.c.b16 %v1469, %v1468
    %v1736 = vpack.c.b16 %v1471, %v1470
    %v1737 = vpack.c.b16 %v1473, %v1472
    %v1738 = vpack.c.b16 %v1475, %v1474
    %v1739 = vpack.c.b16 %v1477, %v1476
    %v1740 = vpack.c.b16 %v1479, %v1478
    %v1741 = vpack.c.b16 %v1481, %v1480
    %v1742 = vpack.c.b16 %v1483, %v1482
    %v1743 = vpack.c.b16 %v1485, %v1484
    %v1744 = vpack.c.b16 %v1487, %v1486
    %v1745 = vpack.c.b16 %v1489, %v1488
    %v1746 = vpack.c.b16 %v1491, %v1490
    %v1747 = vpack.c.b16 %v1493, %v1492
    %v1748 = vpack.c.b16 %v1495, %v1494
    %v1749 = vpack.c.b16 %v1497, %v1496
    %v1750 = vpack.c.b16 %v1499, %v1498
    %v1751 = vpack.c.b16 %v1501, %v1500
    %v1752 = vpack.c.b16 %v1503, %v1502
    %v1753 = vpack.c.b16 %v1505, %v1504
    %v1754 = vpack.c.b16 %v1507, %v1506
    %v1755 = vpack.c.b16 %v1509, %v1508
    %v1756 = vpack.c.b16 %v1511, %v1510
    %v1757 = vpack.c.b16 %v1513, %v1512
    %v1758 = vpack.c.b16 %v1515, %v1514
    %v1759 = vpack.c.b16 %v1517, %v1516
    %v1760 = vpack.c.b16 %v1519, %v1518
    %v1761 = vpack.c.b16 %v1521, %v1520
    %v1762 = vpack.c.b16 %v1523, %v1522
    %v1763 = vpack.c.b16 %v1525, %v1524
    %v1764 = vpack.c.b16 %v1527, %v1526
    %v1765 = vpack.c.b16 %v1529, %v1528
    %v1766 = vpack.c.b16 %v1531, %v1530
    %v1767 = vpack.c.b16 %v1533, %v1532
    %v1768 = vpack.c.b16 %v1535, %v1534
    %v1769 = vpack.c.b16 %v1537, %v1536
    %2002 = vmatprep.subr.bf16.mxu0 0
    %2003 = vmatpush1.bf16.msra.mxu0 %v1538
    %2004 = vmatprep.subr.bf16.mxu0 0
    %2005 = vmatpush1.bf16.msra.mxu0 %v1539
    %2006 = vmatprep.subr.bf16.mxu0 0
    %2007 = vmatpush1.bf16.msra.mxu0 %v1540
    %2008 = vmatprep.subr.bf16.mxu0 0
    %2009 = vmatpush1.bf16.msra.mxu0 %v1541
    %2010 = vmatprep.subr.bf16.mxu0 0
    %2011 = vmatpush1.bf16.msra.mxu0 %v1542
    %2012 = vmatprep.subr.bf16.mxu0 0
    %2013 = vmatpush1.bf16.msra.mxu0 %v1543
    %2014 = vmatprep.subr.bf16.mxu0 0
    %2015 = vmatpush1.bf16.msra.mxu0 %v1544
    %2016 = vmatprep.subr.bf16.mxu0 0
    %2017 = vmatpush1.bf16.msra.mxu0 %v1545
    %2018 = vmatprep.subr.bf16.mxu0 0
    %2019 = vmatpush1.bf16.msra.mxu0 %v1546
    %2020 = vmatprep.subr.bf16.mxu0 0
    %2021 = vmatpush1.bf16.msra.mxu0 %v1547
    %2022 = vmatprep.subr.bf16.mxu0 0
    %2023 = vmatpush1.bf16.msra.mxu0 %v1548
    %2024 = vmatprep.subr.bf16.mxu0 0
    %2025 = vmatpush1.bf16.msra.mxu0 %v1549
    %2026 = vmatprep.subr.bf16.mxu0 0
    %2027 = vmatpush1.bf16.msra.mxu0 %v1550
    %2028 = vmatprep.subr.bf16.mxu0 0
    %2029 = vmatpush1.bf16.msra.mxu0 %v1551
    %2030 = vmatprep.subr.bf16.mxu0 0
    %2031 = vmatpush1.bf16.msra.mxu0 %v1552
    %2032 = vmatprep.subr.bf16.mxu0 0
    %2033 = vmatpush1.bf16.msra.mxu0 %v1553
    %2034 = vmatprep.mubr.bf16.mxu0 %v553
    %2035 = vmatmul.mubr.bf16.gmra.mrb[0].mxu0 %v552
    %v2036 = vpop.f32.mrb[0].mxu0
    %v2037 = vadd.f32 %v506, %v2036
    %v2038 = vpop.f32.mrb[0].mxu0
    %v2039 = vpop.f32.mrb[0].mxu0
    %v2040 = vpop.f32.mrb[0].mxu0
    %2041 = vdwg.mxu0
    %2042 = vmatprep.subr.bf16.mxu0 0
    %2043 = vmatpush1.bf16.msra.mxu0 %v1554
    %2044 = vmatprep.subr.bf16.mxu0 0
    %2045 = vmatpush1.bf16.msra.mxu0 %v1555
    %2046 = vmatprep.subr.bf16.mxu0 0
    %2047 = vmatpush1.bf16.msra.mxu0 %v1556
    %2048 = vmatprep.subr.bf16.mxu0 0
    %2049 = vmatpush1.bf16.msra.mxu0 %v1557
    %2050 = vmatprep.subr.bf16.mxu0 0
    %2051 = vmatpush1.bf16.msra.mxu0 %v1558
    %2052 = vmatprep.subr.bf16.mxu0 0
    %2053 = vmatpush1.bf16.msra.mxu0 %v1559
    %2054 = vmatprep.subr.bf16.mxu0 0
    %2055 = vmatpush1.bf16.msra.mxu0 %v1560
    %2056 = vmatprep.subr.bf16.mxu0 0
    %2057 = vmatpush1.bf16.msra.mxu0 %v1561
    %2058 = vmatprep.subr.bf16.mxu0 0
    %2059 = vmatpush1.bf16.msra.mxu0 %v1562
    %2060 = vmatprep.subr.bf16.mxu0 0
    %2061 = vmatpush1.bf16.msra.mxu0 %v1563
    %2062 = vmatprep.subr.bf16.mxu0 0
    %2063 = vmatpush1.bf16.msra.mxu0 %v1564
    %2064 = vmatprep.subr.bf16.mxu0 0
    %2065 = vmatpush1.bf16.msra.mxu0 %v1565
    %2066 = vmatprep.subr.bf16.mxu0 0
    %2067 = vmatpush1.bf16.msra.mxu0 %v1566
    %2068 = vmatprep.subr.bf16.mxu0 0
    %2069 = vmatpush1.bf16.msra.mxu0 %v1567
    %2070 = vmatprep.subr.bf16.mxu0 0
    %2071 = vmatpush1.bf16.msra.mxu0 %v1568
    %2072 = vmatprep.subr.bf16.mxu0 0
    %2073 = vmatpush1.bf16.msra.mxu0 %v1569
    %2074 = vmatprep.mubr.bf16.mxu0 %v555
    %2075 = vmatmul.mubr.bf16.gmra.mrb[0].mxu0 %v554
    %v2076 = vpop.f32.mrb[0].mxu0
    %v2077 = vadd.f32 %v2037, %v2076
    %v2078 = vpop.f32.mrb[0].mxu0
    %v2079 = vpop.f32.mrb[0].mxu0
    %v2080 = vpop.f32.mrb[0].mxu0
    %2081 = vdwg.mxu0
    %2082 = vmatprep.subr.bf16.mxu0 0
    %2083 = vmatpush1.bf16.msra.mxu0 %v1570
    %2084 = vmatprep.subr.bf16.mxu0 0
    %2085 = vmatpush1.bf16.msra.mxu0 %v1571
    %2086 = vmatprep.subr.bf16.mxu0 0
    %2087 = vmatpush1.bf16.msra.mxu0 %v1572
    %2088 = vmatprep.subr.bf16.mxu0 0
    %2089 = vmatpush1.bf16.msra.mxu0 %v1573
    %2090 = vmatprep.subr.bf16.mxu0 0
    %2091 = vmatpush1.bf16.msra.mxu0 %v1574
    %2092 = vmatprep.subr.bf16.mxu0 0
    %2093 = vmatpush1.bf16.msra.mxu0 %v1575
    %2094 = vmatprep.subr.bf16.mxu0 0
    %2095 = vmatpush1.bf16.msra.mxu0 %v1576
    %2096 = vmatprep.subr.bf16.mxu0 0
    %2097 = vmatpush1.bf16.msra.mxu0 %v1577
    %2098 = vmatprep.subr.bf16.mxu0 0
    %2099 = vmatpush1.bf16.msra.mxu0 %v1578
    %2100 = vmatprep.subr.bf16.mxu0 0
    %2101 = vmatpush1.bf16.msra.mxu0 %v1579
    %2102 = vmatprep.subr.bf16.mxu0 0
    %2103 = vmatpush1.bf16.msra.mxu0 %v1580
    %2104 = vmatprep.subr.bf16.mxu0 0
    %2105 = vmatpush1.bf16.msra.mxu0 %v1581
    %2106 = vmatprep.subr.bf16.mxu0 0
    %2107 = vmatpush1.bf16.msra.mxu0 %v1582
    %2108 = vmatprep.subr.bf16.mxu0 0
    %2109 = vmatpush1.bf16.msra.mxu0 %v1583
    %2110 = vmatprep.subr.bf16.mxu0 0
    %2111 = vmatpush1.bf16.msra.mxu0 %v1584
    %2112 = vmatprep.subr.bf16.mxu0 0
    %2113 = vmatpush1.bf16.msra.mxu0 %v1585
    %2114 = vmatprep.mubr.bf16.mxu0 %v557
    %2115 = vmatmul.mubr.bf16.gmra.mrb[0].mxu0 %v556
    %v2116 = vpop.f32.mrb[0].mxu0
    %v2117 = vadd.f32 %v2077, %v2116
    %v2118 = vpop.f32.mrb[0].mxu0
    %v2119 = vpop.f32.mrb[0].mxu0
    %v2120 = vpop.f32.mrb[0].mxu0
    %2121 = vdwg.mxu0
    %2122 = vmatprep.subr.bf16.mxu0 0
    %2123 = vmatpush1.bf16.msra.mxu0 %v1586
    %2124 = vmatprep.subr.bf16.mxu0 0
    %2125 = vmatpush1.bf16.msra.mxu0 %v1587
    %2126 = vmatprep.subr.bf16.mxu0 0
    %2127 = vmatpush1.bf16.msra.mxu0 %v1588
    %2128 = vmatprep.subr.bf16.mxu0 0
    %2129 = vmatpush1.bf16.msra.mxu0 %v1589
    %2130 = vmatprep.subr.bf16.mxu0 0
    %2131 = vmatpush1.bf16.msra.mxu0 %v1590
    %2132 = vmatprep.subr.bf16.mxu0 0
    %2133 = vmatpush1.bf16.msra.mxu0 %v1591
    %2134 = vmatprep.subr.bf16.mxu0 0
    %2135 = vmatpush1.bf16.msra.mxu0 %v1592
    %2136 = vmatprep.subr.bf16.mxu0 0
    %2137 = vmatpush1.bf16.msra.mxu0 %v1593
    %2138 = vmatprep.subr.bf16.mxu0 0
    %2139 = vmatpush1.bf16.msra.mxu0 %v1594
    %2140 = vmatprep.subr.bf16.mxu0 0
    %2141 = vmatpush1.bf16.msra.mxu0 %v1595
    %2142 = vmatprep.subr.bf16.mxu0 0
    %2143 = vmatpush1.bf16.msra.mxu0 %v1596
    %2144 = vmatprep.subr.bf16.mxu0 0
    %2145 = vmatpush1.bf16.msra.mxu0 %v1597
    %2146 = vmatprep.subr.bf16.mxu0 0
    %2147 = vmatpush1.bf16.msra.mxu0 %v1598
    %2148 = vmatprep.subr.bf16.mxu0 0
    %2149 = vmatpush1.bf16.msra.mxu0 %v1599
    %2150 = vmatprep.subr.bf16.mxu0 0
    %2151 = vmatpush1.bf16.msra.mxu0 %v1600
    %2152 = vmatprep.subr.bf16.mxu0 0
    %2153 = vmatpush1.bf16.msra.mxu0 %v1601
    %2154 = vmatprep.mubr.bf16.mxu0 %v559
    %2155 = vmatmul.mubr.bf16.gmra.mrb[0].mxu0 %v558
    %v2156 = vpop.f32.mrb[0].mxu0
    %v2157 = vadd.f32 %v2117, %v2156
    %v2158 = vpop.f32.mrb[0].mxu0
    %v2159 = vpop.f32.mrb[0].mxu0
    %v2160 = vpop.f32.mrb[0].mxu0
    %2161 = vdwg.mxu0
    %2162 = vmatprep.subr.bf16.mxu0 0
    %2163 = vmatpush1.bf16.msra.mxu0 %v1602
    %2164 = vmatprep.subr.bf16.mxu0 0
    %2165 = vmatpush1.bf16.msra.mxu0 %v1603
    %2166 = vmatprep.subr.bf16.mxu0 0
    %2167 = vmatpush1.bf16.msra.mxu0 %v1604
    %2168 = vmatprep.subr.bf16.mxu0 0
    %2169 = vmatpush1.bf16.msra.mxu0 %v1605
    %2170 = vmatprep.subr.bf16.mxu0 0
    %2171 = vmatpush1.bf16.msra.mxu0 %v1606
    %2172 = vmatprep.subr.bf16.mxu0 0
    %2173 = vmatpush1.bf16.msra.mxu0 %v1607
    %2174 = vmatprep.subr.bf16.mxu0 0
    %2175 = vmatpush1.bf16.msra.mxu0 %v1608
    %2176 = vmatprep.subr.bf16.mxu0 0
    %2177 = vmatpush1.bf16.msra.mxu0 %v1609
    %2178 = vmatprep.subr.bf16.mxu0 0
    %2179 = vmatpush1.bf16.msra.mxu0 %v1610
    %2180 = vmatprep.subr.bf16.mxu0 0
    %2181 = vmatpush1.bf16.msra.mxu0 %v1611
    %2182 = vmatprep.subr.bf16.mxu0 0
    %2183 = vmatpush1.bf16.msra.mxu0 %v1612
    %2184 = vmatprep.subr.bf16.mxu0 0
    %2185 = vmatpush1.bf16.msra.mxu0 %v1613
    %2186 = vmatprep.subr.bf16.mxu0 0
    %2187 = vmatpush1.bf16.msra.mxu0 %v1614
    %2188 = vmatprep.subr.bf16.mxu0 0
    %2189 = vmatpush1.bf16.msra.mxu0 %v1615
    %2190 = vmatprep.subr.bf16.mxu0 0
    %2191 = vmatpush1.bf16.msra.mxu0 %v1616
    %2192 = vmatprep.subr.bf16.mxu0 0
    %2193 = vmatpush1.bf16.msra.mxu0 %v1617
    %2194 = vmatprep.mubr.bf16.mxu0 %v561
    %2195 = vmatmul.mubr.bf16.gmra.mrb[0].mxu0 %v560
    %v2196 = vpop.f32.mrb[0].mxu0
    %v2197 = vadd.f32 %v2157, %v2196
    %v2198 = vpop.f32.mrb[0].mxu0
    %v2199 = vpop.f32.mrb[0].mxu0
    %v2200 = vpop.f32.mrb[0].mxu0
    %2201 = vdwg.mxu0
    %2202 = vmatprep.subr.bf16.mxu0 0
    %2203 = vmatpush1.bf16.msra.mxu0 %v1618
    %2204 = vmatprep.subr.bf16.mxu0 0
    %2205 = vmatpush1.bf16.msra.mxu0 %v1619
    %2206 = vmatprep.subr.bf16.mxu0 0
    %2207 = vmatpush1.bf16.msra.mxu0 %v1620
    %2208 = vmatprep.subr.bf16.mxu0 0
    %2209 = vmatpush1.bf16.msra.mxu0 %v1621
    %2210 = vmatprep.subr.bf16.mxu0 0
    %2211 = vmatpush1.bf16.msra.mxu0 %v1622
    %2212 = vmatprep.subr.bf16.mxu0 0
    %2213 = vmatpush1.bf16.msra.mxu0 %v1623
    %2214 = vmatprep.subr.bf16.mxu0 0
    %2215 = vmatpush1.bf16.msra.mxu0 %v1624
    %2216 = vmatprep.subr.bf16.mxu0 0
    %2217 = vmatpush1.bf16.msra.mxu0 %v1625
    %2218 = vmatprep.subr.bf16.mxu0 0
    %2219 = vmatpush1.bf16.msra.mxu0 %v1626
    %2220 = vmatprep.subr.bf16.mxu0 0
    %2221 = vmatpush1.bf16.msra.mxu0 %v1627
    %2222 = vmatprep.subr.bf16.mxu0 0
    %2223 = vmatpush1.bf16.msra.mxu0 %v1628
    %2224 = vmatprep.subr.bf16.mxu0 0
    %2225 = vmatpush1.bf16.msra.mxu0 %v1629
    %2226 = vmatprep.subr.bf16.mxu0 0
    %2227 = vmatpush1.bf16.msra.mxu0 %v1630
    %2228 = vmatprep.subr.bf16.mxu0 0
    %2229 = vmatpush1.bf16.msra.mxu0 %v1631
    %2230 = vmatprep.subr.bf16.mxu0 0
    %2231 = vmatpush1.bf16.msra.mxu0 %v1632
    %2232 = vmatprep.subr.bf16.mxu0 0
    %2233 = vmatpush1.bf16.msra.mxu0 %v1633
    %2234 = vmatprep.mubr.bf16.mxu0 %v563
    %2235 = vmatmul.mubr.bf16.gmra.mrb[0].mxu0 %v562
    %v2236 = vpop.f32.mrb[0].mxu0
    %v2237 = vadd.f32 %v2197, %v2236
    %v2238 = vpop.f32.mrb[0].mxu0
    %v2239 = vpop.f32.mrb[0].mxu0
    %v2240 = vpop.f32.mrb[0].mxu0
    %2241 = vdwg.mxu0
    %2242 = vmatprep.subr.bf16.mxu0 0
    %2243 = vmatpush1.bf16.msra.mxu0 %v1634
    %2244 = vmatprep.subr.bf16.mxu0 0
    %2245 = vmatpush1.bf16.msra.mxu0 %v1635
    %2246 = vmatprep.subr.bf16.mxu0 0
    %2247 = vmatpush1.bf16.msra.mxu0 %v1636
    %2248 = vmatprep.subr.bf16.mxu0 0
    %2249 = vmatpush1.bf16.msra.mxu0 %v1637
    %2250 = vmatprep.subr.bf16.mxu0 0
    %2251 = vmatpush1.bf16.msra.mxu0 %v1638
    %2252 = vmatprep.subr.bf16.mxu0 0
    %2253 = vmatpush1.bf16.msra.mxu0 %v1639
    %2254 = vmatprep.subr.bf16.mxu0 0
    %2255 = vmatpush1.bf16.msra.mxu0 %v1640
    %2256 = vmatprep.subr.bf16.mxu0 0
    %2257 = vmatpush1.bf16.msra.mxu0 %v1641
    %2258 = vmatprep.subr.bf16.mxu0 0
    %2259 = vmatpush1.bf16.msra.mxu0 %v1642
    %2260 = vmatprep.subr.bf16.mxu0 0
    %2261 = vmatpush1.bf16.msra.mxu0 %v1643
    %2262 = vmatprep.subr.bf16.mxu0 0
    %2263 = vmatpush1.bf16.msra.mxu0 %v1644
    %2264 = vmatprep.subr.bf16.mxu0 0
    %2265 = vmatpush1.bf16.msra.mxu0 %v1645
    %2266 = vmatprep.subr.bf16.mxu0 0
    %2267 = vmatpush1.bf16.msra.mxu0 %v1646
    %2268 = vmatprep.subr.bf16.mxu0 0
    %2269 = vmatpush1.bf16.msra.mxu0 %v1647
    %2270 = vmatprep.subr.bf16.mxu0 0
    %2271 = vmatpush1.bf16.msra.mxu0 %v1648
    %2272 = vmatprep.subr.bf16.mxu0 0
    %2273 = vmatpush1.bf16.msra.mxu0 %v1649
    %2274 = vmatprep.mubr.bf16.mxu0 %v565
    %2275 = vmatmul.mubr.bf16.gmra.mrb[0].mxu0 %v564
    %v2276 = vpop.f32.mrb[0].mxu0
    %v2277 = vadd.f32 %v2237, %v2276
    %v2278 = vpop.f32.mrb[0].mxu0
    %v2279 = vpop.f32.mrb[0].mxu0
    %v2280 = vpop.f32.mrb[0].mxu0
    %2281 = vdwg.mxu0
    %2282 = vmatprep.subr.bf16.mxu0 0
    %2283 = vmatpush1.bf16.msra.mxu0 %v1650
    %2284 = vmatprep.subr.bf16.mxu0 0
    %2285 = vmatpush1.bf16.msra.mxu0 %v1651
    %2286 = vmatprep.subr.bf16.mxu0 0
    %2287 = vmatpush1.bf16.msra.mxu0 %v1652
    %2288 = vmatprep.subr.bf16.mxu0 0
    %2289 = vmatpush1.bf16.msra.mxu0 %v1653
    %2290 = vmatprep.subr.bf16.mxu0 0
    %2291 = vmatpush1.bf16.msra.mxu0 %v1654
    %2292 = vmatprep.subr.bf16.mxu0 0
    %2293 = vmatpush1.bf16.msra.mxu0 %v1655
    %2294 = vmatprep.subr.bf16.mxu0 0
    %2295 = vmatpush1.bf16.msra.mxu0 %v1656
    %2296 = vmatprep.subr.bf16.mxu0 0
    %2297 = vmatpush1.bf16.msra.mxu0 %v1657
    %2298 = vmatprep.subr.bf16.mxu0 0
    %2299 = vmatpush1.bf16.msra.mxu0 %v1658
    %2300 = vmatprep.subr.bf16.mxu0 0
    %2301 = vmatpush1.bf16.msra.mxu0 %v1659
    %2302 = vmatprep.subr.bf16.mxu0 0
    %2303 = vmatpush1.bf16.msra.mxu0 %v1660
    %2304 = vmatprep.subr.bf16.mxu0 0
    %2305 = vmatpush1.bf16.msra.mxu0 %v1661
    %2306 = vmatprep.subr.bf16.mxu0 0
    %2307 = vmatpush1.bf16.msra.mxu0 %v1662
    %2308 = vmatprep.subr.bf16.mxu0 0
    %2309 = vmatpush1.bf16.msra.mxu0 %v1663
    %2310 = vmatprep.subr.bf16.mxu0 0
    %2311 = vmatpush1.bf16.msra.mxu0 %v1664
    %2312 = vmatprep.subr.bf16.mxu0 0
    %2313 = vmatpush1.bf16.msra.mxu0 %v1665
    %2314 = vmatprep.mubr.bf16.mxu0 %v567
    %2315 = vmatmul.mubr.bf16.gmra.mrb[0].mxu0 %v566
    %v2316 = vpop.f32.mrb[0].mxu0
    %v2317 = vadd.f32 %v2277, %v2316
    %v2318 = vpop.f32.mrb[0].mxu0
    %v2319 = vpop.f32.mrb[0].mxu0
    %v2320 = vpop.f32.mrb[0].mxu0
    %2321 = vdwg.mxu0
    %2322 = vmatprep.subr.bf16.mxu0 0
    %2323 = vmatpush1.bf16.msra.mxu0 %v1666
    %2324 = vmatprep.subr.bf16.mxu0 0
    %2325 = vmatpush1.bf16.msra.mxu0 %v1667
    %2326 = vmatprep.subr.bf16.mxu0 0
    %2327 = vmatpush1.bf16.msra.mxu0 %v1668
    %2328 = vmatprep.subr.bf16.mxu0 0
    %2329 = vmatpush1.bf16.msra.mxu0 %v1669
    %2330 = vmatprep.subr.bf16.mxu0 0
    %2331 = vmatpush1.bf16.msra.mxu0 %v1670
    %2332 = vmatprep.subr.bf16.mxu0 0
    %2333 = vmatpush1.bf16.msra.mxu0 %v1671
    %2334 = vmatprep.subr.bf16.mxu0 0
    %2335 = vmatpush1.bf16.msra.mxu0 %v1672
    %2336 = vmatprep.subr.bf16.mxu0 0
    %2337 = vmatpush1.bf16.msra.mxu0 %v1673
    %2338 = vmatprep.subr.bf16.mxu0 0
    %2339 = vmatpush1.bf16.msra.mxu0 %v1674
    %2340 = vmatprep.subr.bf16.mxu0 0
    %2341 = vmatpush1.bf16.msra.mxu0 %v1675
    %2342 = vmatprep.subr.bf16.mxu0 0
    %2343 = vmatpush1.bf16.msra.mxu0 %v1676
    %2344 = vmatprep.subr.bf16.mxu0 0
    %2345 = vmatpush1.bf16.msra.mxu0 %v1677
    %2346 = vmatprep.subr.bf16.mxu0 0
    %2347 = vmatpush1.bf16.msra.mxu0 %v1678
    %2348 = vmatprep.subr.bf16.mxu0 0
    %2349 = vmatpush1.bf16.msra.mxu0 %v1679
    %2350 = vmatprep.subr.bf16.mxu0 0
    %2351 = vmatpush1.bf16.msra.mxu0 %v1680
    %2352 = vmatprep.subr.bf16.mxu0 0
    %2353 = vmatpush1.bf16.msra.mxu0 %v1681
    %2354 = vmatprep.mubr.bf16.mxu0 %v569
    %2355 = vmatmul.mubr.bf16.gmra.mrb[0].mxu0 %v568
    %v2356 = vpop.f32.mrb[0].mxu0
    %v2357 = vadd.f32 %v2317, %v2356
    %v2358 = vpop.f32.mrb[0].mxu0
    %v2359 = vpop.f32.mrb[0].mxu0
    %v2360 = vpop.f32.mrb[0].mxu0
    %2361 = vdwg.mxu0
    %2362 = vmatprep.subr.bf16.mxu0 0
    %2363 = vmatpush1.bf16.msra.mxu0 %v1682
    %2364 = vmatprep.subr.bf16.mxu0 0
    %2365 = vmatpush1.bf16.msra.mxu0 %v1683
    %2366 = vmatprep.subr.bf16.mxu0 0
    %2367 = vmatpush1.bf16.msra.mxu0 %v1684
    %2368 = vmatprep.subr.bf16.mxu0 0
    %2369 = vmatpush1.bf16.msra.mxu0 %v1685
    %2370 = vmatprep.subr.bf16.mxu0 0
    %2371 = vmatpush1.bf16.msra.mxu0 %v1686
    %2372 = vmatprep.subr.bf16.mxu0 0
    %2373 = vmatpush1.bf16.msra.mxu0 %v1687
    %2374 = vmatprep.subr.bf16.mxu0 0
    %2375 = vmatpush1.bf16.msra.mxu0 %v1688
    %2376 = vmatprep.subr.bf16.mxu0 0
    %2377 = vmatpush1.bf16.msra.mxu0 %v1689
    %2378 = vmatprep.subr.bf16.mxu0 0
    %2379 = vmatpush1.bf16.msra.mxu0 %v1690
    %2380 = vmatprep.subr.bf16.mxu0 0
    %2381 = vmatpush1.bf16.msra.mxu0 %v1691
    %2382 = vmatprep.subr.bf16.mxu0 0
    %2383 = vmatpush1.bf16.msra.mxu0 %v1692
    %2384 = vmatprep.subr.bf16.mxu0 0
    %2385 = vmatpush1.bf16.msra.mxu0 %v1693
    %2386 = vmatprep.subr.bf16.mxu0 0
    %2387 = vmatpush1.bf16.msra.mxu0 %v1694
    %2388 = vmatprep.subr.bf16.mxu0 0
    %2389 = vmatpush1.bf16.msra.mxu0 %v1695
    %2390 = vmatprep.subr.bf16.mxu0 0
    %2391 = vmatpush1.bf16.msra.mxu0 %v1696
    %2392 = vmatprep.subr.bf16.mxu0 0
    %2393 = vmatpush1.bf16.msra.mxu0 %v1697
    %2394 = vmatprep.mubr.bf16.mxu0 %v571
    %2395 = vmatmul.mubr.bf16.gmra.mrb[0].mxu0 %v570
    %v2396 = vpop.f32.mrb[0].mxu0
    %v2397 = vadd.f32 %v2357, %v2396
    %v2398 = vpop.f32.mrb[0].mxu0
    %v2399 = vpop.f32.mrb[0].mxu0
    %v2400 = vpop.f32.mrb[0].mxu0
    %2401 = vdwg.mxu0
    %2402 = vmatprep.subr.bf16.mxu0 0
    %2403 = vmatpush1.bf16.msra.mxu0 %v1698
    %2404 = vmatprep.subr.bf16.mxu0 0
    %2405 = vmatpush1.bf16.msra.mxu0 %v1699
    %2406 = vmatprep.subr.bf16.mxu0 0
    %2407 = vmatpush1.bf16.msra.mxu0 %v1700
    %2408 = vmatprep.subr.bf16.mxu0 0
    %2409 = vmatpush1.bf16.msra.mxu0 %v1701
    %2410 = vmatprep.subr.bf16.mxu0 0
    %2411 = vmatpush1.bf16.msra.mxu0 %v1702
    %2412 = vmatprep.subr.bf16.mxu0 0
    %2413 = vmatpush1.bf16.msra.mxu0 %v1703
    %2414 = vmatprep.subr.bf16.mxu0 0
    %2415 = vmatpush1.bf16.msra.mxu0 %v1704
    %2416 = vmatprep.subr.bf16.mxu0 0
    %2417 = vmatpush1.bf16.msra.mxu0 %v1705
    %2418 = vmatprep.subr.bf16.mxu0 0
    %2419 = vmatpush1.bf16.msra.mxu0 %v1706
    %2420 = vmatprep.subr.bf16.mxu0 0
    %2421 = vmatpush1.bf16.msra.mxu0 %v1707
    %2422 = vmatprep.subr.bf16.mxu0 0
    %2423 = vmatpush1.bf16.msra.mxu0 %v1708
    %2424 = vmatprep.subr.bf16.mxu0 0
    %2425 = vmatpush1.bf16.msra.mxu0 %v1709
    %2426 = vmatprep.subr.bf16.mxu0 0
    %2427 = vmatpush1.bf16.msra.mxu0 %v1710
    %2428 = vmatprep.subr.bf16.mxu0 0
    %2429 = vmatpush1.bf16.msra.mxu0 %v1711
    %2430 = vmatprep.subr.bf16.mxu0 0
    %2431 = vmatpush1.bf16.msra.mxu0 %v1712
    %2432 = vmatprep.subr.bf16.mxu0 0
    %2433 = vmatpush1.bf16.msra.mxu0 %v1713
    %2434 = vmatprep.mubr.bf16.mxu0 %v573
    %2435 = vmatmul.mubr.bf16.gmra.mrb[0].mxu0 %v572
    %v2436 = vpop.f32.mrb[0].mxu0
    %v2437 = vadd.f32 %v2397, %v2436
    %v2438 = vpop.f32.mrb[0].mxu0
    %v2439 = vpop.f32.mrb[0].mxu0
    %v2440 = vpop.f32.mrb[0].mxu0
    %2441 = vdwg.mxu0
    %2442 = vmatprep.subr.bf16.mxu0 0
    %2443 = vmatpush1.bf16.msra.mxu0 %v1714
    %2444 = vmatprep.subr.bf16.mxu0 0
    %2445 = vmatpush1.bf16.msra.mxu0 %v1715
    %2446 = vmatprep.subr.bf16.mxu0 0
    %2447 = vmatpush1.bf16.msra.mxu0 %v1716
    %2448 = vmatprep.subr.bf16.mxu0 0
    %2449 = vmatpush1.bf16.msra.mxu0 %v1717
    %2450 = vmatprep.subr.bf16.mxu0 0
    %2451 = vmatpush1.bf16.msra.mxu0 %v1718
    %2452 = vmatprep.subr.bf16.mxu0 0
    %2453 = vmatpush1.bf16.msra.mxu0 %v1719
    %2454 = vmatprep.subr.bf16.mxu0 0
    %2455 = vmatpush1.bf16.msra.mxu0 %v1720
    %2456 = vmatprep.subr.bf16.mxu0 0
    %2457 = vmatpush1.bf16.msra.mxu0 %v1721
    %2458 = vmatprep.subr.bf16.mxu0 0
    %2459 = vmatpush1.bf16.msra.mxu0 %v1722
    %2460 = vmatprep.subr.bf16.mxu0 0
    %2461 = vmatpush1.bf16.msra.mxu0 %v1723
    %2462 = vmatprep.subr.bf16.mxu0 0
    %2463 = vmatpush1.bf16.msra.mxu0 %v1724
    %2464 = vmatprep.subr.bf16.mxu0 0
    %2465 = vmatpush1.bf16.msra.mxu0 %v1725
    %2466 = vmatprep.subr.bf16.mxu0 0
    %2467 = vmatpush1.bf16.msra.mxu0 %v1726
    %2468 = vmatprep.subr.bf16.mxu0 0
    %2469 = vmatpush1.bf16.msra.mxu0 %v1727
    %2470 = vmatprep.subr.bf16.mxu0 0
    %2471 = vmatpush1.bf16.msra.mxu0 %v1728
    %2472 = vmatprep.subr.bf16.mxu0 0
    %2473 = vmatpush1.bf16.msra.mxu0 %v1729
    %2474 = vmatprep.mubr.bf16.mxu0 %v575
    %2475 = vmatmul.mubr.bf16.gmra.mrb[0].mxu0 %v574
    %v2476 = vpop.f32.mrb[0].mxu0
    %v2477 = vadd.f32 %v2437, %v2476
    %v2478 = vpop.f32.mrb[0].mxu0
    %v2479 = vpop.f32.mrb[0].mxu0
    %v2480 = vpop.f32.mrb[0].mxu0
    %2481 = vdwg.mxu0
    %2482 = vmatprep.subr.bf16.mxu0 0
    %2483 = vmatpush1.bf16.msra.mxu0 %v1730
    %2484 = vmatprep.subr.bf16.mxu0 0
    %2485 = vmatpush1.bf16.msra.mxu0 %v1731
    %2486 = vmatprep.subr.bf16.mxu0 0
    %2487 = vmatpush1.bf16.msra.mxu0 %v1732
    %2488 = vmatprep.subr.bf16.mxu0 0
    %2489 = vmatpush1.bf16.msra.mxu0 %v1733
    %2490 = vmatprep.subr.bf16.mxu0 0
    %2491 = vmatpush1.bf16.msra.mxu0 %v1734
    %2492 = vmatprep.subr.bf16.mxu0 0
    %2493 = vmatpush1.bf16.msra.mxu0 %v1735
    %2494 = vmatprep.subr.bf16.mxu0 0
    %2495 = vmatpush1.bf16.msra.mxu0 %v1736
    %2496 = vmatprep.subr.bf16.mxu0 0
    %2497 = vmatpush1.bf16.msra.mxu0 %v1737
    %2498 = vmatprep.subr.bf16.mxu0 0
    %2499 = vmatpush1.bf16.msra.mxu0 %v1738
    %2500 = vmatprep.subr.bf16.mxu0 0
    %2501 = vmatpush1.bf16.msra.mxu0 %v1739
    %2502 = vmatprep.subr.bf16.mxu0 0
    %2503 = vmatpush1.bf16.msra.mxu0 %v1740
    %2504 = vmatprep.subr.bf16.mxu0 0
    %2505 = vmatpush1.bf16.msra.mxu0 %v1741
    %2506 = vmatprep.subr.bf16.mxu0 0
    %2507 = vmatpush1.bf16.msra.mxu0 %v1742
    %2508 = vmatprep.subr.bf16.mxu0 0
    %2509 = vmatpush1.bf16.msra.mxu0 %v1743
    %2510 = vmatprep.subr.bf16.mxu0 0
    %2511 = vmatpush1.bf16.msra.mxu0 %v1744
    %2512 = vmatprep.subr.bf16.mxu0 0
    %2513 = vmatpush1.bf16.msra.mxu0 %v1745
    %2514 = vmatprep.mubr.bf16.mxu0 %v577
    %2515 = vmatmul.mubr.bf16.gmra.mrb[0].mxu0 %v576
    %v2516 = vpop.f32.mrb[0].mxu0
    %v2517 = vadd.f32 %v2477, %v2516
    %v2518 = vpop.f32.mrb[0].mxu0
    %v2519 = vpop.f32.mrb[0].mxu0
    %v2520 = vpop.f32.mrb[0].mxu0
    %2521 = vdwg.mxu0
    %2522 = vmatprep.subr.bf16.mxu0 0
    %2523 = vmatpush1.bf16.msra.mxu0 %v1746
    %2524 = vmatprep.subr.bf16.mxu0 0
    %2525 = vmatpush1.bf16.msra.mxu0 %v1747
    %2526 = vmatprep.subr.bf16.mxu0 0
    %2527 = vmatpush1.bf16.msra.mxu0 %v1748
    %2528 = vmatprep.subr.bf16.mxu0 0
    %2529 = vmatpush1.bf16.msra.mxu0 %v1749
    %2530 = vmatprep.subr.bf16.mxu0 0
    %2531 = vmatpush1.bf16.msra.mxu0 %v1750
    %2532 = vmatprep.subr.bf16.mxu0 0
    %2533 = vmatpush1.bf16.msra.mxu0 %v1751
    %2534 = vmatprep.subr.bf16.mxu0 0
    %2535 = vmatpush1.bf16.msra.mxu0 %v1752
    %2536 = vmatprep.subr.bf16.mxu0 0
    %2537 = vmatpush1.bf16.msra.mxu0 %v1753
    %2538 = vmatprep.subr.bf16.mxu0 0
    %2539 = vmatpush1.bf16.msra.mxu0 %v1754
    %2540 = vmatprep.subr.bf16.mxu0 0
    %2541 = vmatpush1.bf16.msra.mxu0 %v1755
    %2542 = vmatprep.subr.bf16.mxu0 0
    %2543 = vmatpush1.bf16.msra.mxu0 %v1756
    %2544 = vmatprep.subr.bf16.mxu0 0
    %2545 = vmatpush1.bf16.msra.mxu0 %v1757
    %2546 = vmatprep.subr.bf16.mxu0 0
    %2547 = vmatpush1.bf16.msra.mxu0 %v1758
    %2548 = vmatprep.subr.bf16.mxu0 0
    %2549 = vmatpush1.bf16.msra.mxu0 %v1759
    %2550 = vmatprep.subr.bf16.mxu0 0
    %2551 = vmatpush1.bf16.msra.mxu0 %v1760
    %2552 = vmatprep.subr.bf16.mxu0 0
    %2553 = vmatpush1.bf16.msra.mxu0 %v1761
    %2554 = vmatprep.mubr.bf16.mxu0 %v579
    %2555 = vmatmul.mubr.bf16.gmra.mrb[0].mxu0 %v578
    %v2556 = vpop.f32.mrb[0].mxu0
    %v2557 = vadd.f32 %v2517, %v2556
    %v2558 = vpop.f32.mrb[0].mxu0
    %v2559 = vpop.f32.mrb[0].mxu0
    %v2560 = vpop.f32.mrb[0].mxu0
    %2561 = vdwg.mxu0
    %2562 = vmatprep.subr.bf16.mxu0 0
    %2563 = vmatpush1.bf16.msra.mxu0 %v1762
    %2564 = vmatprep.subr.bf16.mxu0 0
    %2565 = vmatpush1.bf16.msra.mxu0 %v1763
    %2566 = vmatprep.subr.bf16.mxu0 0
    %2567 = vmatpush1.bf16.msra.mxu0 %v1764
    %2568 = vmatprep.subr.bf16.mxu0 0
    %2569 = vmatpush1.bf16.msra.mxu0 %v1765
    %2570 = vmatprep.subr.bf16.mxu0 0
    %2571 = vmatpush1.bf16.msra.mxu0 %v1766
    %2572 = vmatprep.subr.bf16.mxu0 0
    %2573 = vmatpush1.bf16.msra.mxu0 %v1767
    %2574 = vmatprep.subr.bf16.mxu0 0
    %2575 = vmatpush1.bf16.msra.mxu0 %v1768
    %2576 = vmatprep.subr.bf16.mxu0 0
    %2577 = vmatpush1.bf16.msra.mxu0 %v1769
    %2578 = vmatprep.subr.bf16.mxu0 0
    %2579 = vmatpush1.bf16.msra.mxu0 0
    %2580 = vmatprep.subr.bf16.mxu0 0
    %2581 = vmatpush1.bf16.msra.mxu0 0
    %2582 = vmatprep.subr.bf16.mxu0 0
    %2583 = vmatpush1.bf16.msra.mxu0 0
    %2584 = vmatprep.subr.bf16.mxu0 0
    %2585 = vmatpush1.bf16.msra.mxu0 0
    %2586 = vmatprep.subr.bf16.mxu0 0
    %2587 = vmatpush1.bf16.msra.mxu0 0
    %2588 = vmatprep.subr.bf16.mxu0 0
    %2589 = vmatpush1.bf16.msra.mxu0 0
    %2590 = vmatprep.subr.bf16.mxu0 0
    %2591 = vmatpush1.bf16.msra.mxu0 0
    %2592 = vmatprep.subr.bf16.mxu0 0
    %2593 = vmatpush1.bf16.msra.mxu0 0
    %2594 = vmatprep.mubr.bf16.mxu0 0
    %2595 = vmatmul.mubr.bf16.gmra.mrb[0].mxu0 %v580
    %v2596 = vpop.f32.mrb[0].mxu0
    %v2597 = vadd.f32 %v2557, %v2596
    %v2598 = vpop.f32.mrb[0].mxu0
    %v2599 = vpop.f32.mrb[0].mxu0
    %v2600 = vpop.f32.mrb[0].mxu0
    %2601 = vdwg.mxu0
    %v2602 = vmax.f32 %v2597, 0.0
    %v2603 = vpack.c.bf16 %v2602, %v2602
    %v2604 = vld [vmem:[%s3] sm:$0xf]
    %v2605 = vld [vmem:[%s3 + $0x4] sm:$0xf]
    %v2606 = vld [vmem:[%s3 + $0x8] sm:$0xf]
    %v2607 = vld [vmem:[%s3 + $0xc] sm:$0xf]
    %v2608 = vld [vmem:[%s3 + $0x10] sm:$0xf]
    %v2609 = vld [vmem:[%s3 + $0x14] sm:$0xf]
    %v2610 = vld [vmem:[%s3 + $0x18] sm:$0xf]
    %v2611 = vld [vmem:[%s3 + $0x1c] sm:$0xf]
    %v2612 = vld [vmem:[%s3 + $0x20] sm:$0xf]
    %v2613 = vld [vmem:[%s3 + $0x24] sm:$0xf]
    %v2614 = vld [vmem:[%s3 + $0x28] sm:$0xf]
    %v2615 = vld [vmem:[%s3 + $0x2c] sm:$0xf]
    %v2616 = vld [vmem:[%s3 + $0x30] sm:$0xf]
    %v2617 = vld [vmem:[%s3 + $0x34] sm:$0xf]
    %v2618 = vld [vmem:[%s3 + $0x38] sm:$0xf]
    %v2619 = vld [vmem:[%s3 + $0x3c] sm:$0xf]
    %v2620 = vld [vmem:[%s4] sm:$0x1]
    %v2622 = vlaneseq
    %v2623 = vshrl.u32 %v2622, 7
    %v2624 = vsub.s32 0, %v2623
    %v2625 = vrot.slane %v2620, %v2624
    %v2643 = vunpack.c.l.b16 %v2604
    %v2644 = vunpack.c.l.b16 %v2605
    %v2645 = vunpack.c.l.b16 %v2606
    %v2646 = vunpack.c.l.b16 %v2607
    %v2647 = vunpack.c.l.b16 %v2608
    %v2648 = vunpack.c.l.b16 %v2609
    %v2649 = vunpack.c.l.b16 %v2610
    %v2650 = vunpack.c.l.b16 %v2611
    %v2651 = vunpack.c.l.b16 %v2612
    %v2652 = vunpack.c.l.b16 %v2613
    %v2653 = vunpack.c.l.b16 %v2614
    %v2654 = vunpack.c.l.b16 %v2615
    %v2655 = vunpack.c.l.b16 %v2616
    %v2656 = vunpack.c.l.b16 %v2617
    %v2657 = vunpack.c.l.b16 %v2618
    %v2658 = vunpack.c.l.b16 %v2619
    %v2659 = vpack.c.b16 %v2644, %v2643
    %v2660 = vpack.c.b16 %v2646, %v2645
    %v2661 = vpack.c.b16 %v2648, %v2647
    %v2662 = vpack.c.b16 %v2650, %v2649
    %v2663 = vpack.c.b16 %v2652, %v2651
    %v2664 = vpack.c.b16 %v2654, %v2653
    %v2665 = vpack.c.b16 %v2656, %v2655
    %v2666 = vpack.c.b16 %v2658, %v2657
    %2675 = vmatprep.subr.bf16.mxu0 0
    %2676 = vmatpush1.bf16.msra.mxu0 %v2659
    %2677 = vmatprep.subr.bf16.mxu0 0
    %2678 = vmatpush1.bf16.msra.mxu0 %v2660
    %2679 = vmatprep.subr.bf16.mxu0 0
    %2680 = vmatpush1.bf16.msra.mxu0 %v2661
    %2681 = vmatprep.subr.bf16.mxu0 0
    %2682 = vmatpush1.bf16.msra.mxu0 %v2662
    %2683 = vmatprep.subr.bf16.mxu0 0
    %2684 = vmatpush1.bf16.msra.mxu0 %v2663
    %2685 = vmatprep.subr.bf16.mxu0 0
    %2686 = vmatpush1.bf16.msra.mxu0 %v2664
    %2687 = vmatprep.subr.bf16.mxu0 0
    %2688 = vmatpush1.bf16.msra.mxu0 %v2665
    %2689 = vmatprep.subr.bf16.mxu0 0
    %2690 = vmatpush1.bf16.msra.mxu0 %v2666
    %2691 = vmatprep.subr.bf16.mxu0 0
    %2692 = vmatpush1.bf16.msra.mxu0 0
    %2693 = vmatprep.subr.bf16.mxu0 0
    %2694 = vmatpush1.bf16.msra.mxu0 0
    %2695 = vmatprep.subr.bf16.mxu0 0
    %2696 = vmatpush1.bf16.msra.mxu0 0
    %2697 = vmatprep.subr.bf16.mxu0 0
    %2698 = vmatpush1.bf16.msra.mxu0 0
    %2699 = vmatprep.subr.bf16.mxu0 0
    %2700 = vmatpush1.bf16.msra.mxu0 0
    %2701 = vmatprep.subr.bf16.mxu0 0
    %2702 = vmatpush1.bf16.msra.mxu0 0
    %2703 = vmatprep.subr.bf16.mxu0 0
    %2704 = vmatpush1.bf16.msra.mxu0 0
    %2705 = vmatprep.subr.bf16.mxu0 0
    %2706 = vmatpush1.bf16.msra.mxu0 0
    %2707 = vmatprep.mubr.bf16.mxu0 0
    %2708 = vmatmul.mubr.bf16.gmra.mrb[0].mxu0 %v2603
    %v2709 = vpop.f32.mrb[0].mxu0
    %v2710 = vadd.f32 %v2625, %v2709
    %v2711 = vpop.f32.mrb[0].mxu0
    %v2712 = vpop.f32.mrb[0].mxu0
    %v2713 = vpop.f32.mrb[0].mxu0
    %2714 = vdwg.mxu0
    %2715 = vst [vmem:[#allocation2] sm:$0xff] %v2710
    // Predicated region
    $region22: #{mlp_forward.1} parent=1 // pred_check
      _
    $region23: #{mlp_forward.1} parent=1 // pred_check_branch
      %2717 = sbr.rel (0) target = $region25
    $region24: #{mlp_forward.1} parent=1 // pred_region
      %s2719 = ssub.s32 128, 128
      %2720 = vsyncadd [#allocation3], %s2719
      %s2722 = sshll.u32 [#allocation2], 4
      %s2723 = int_to_ptr.vmem [resolvable:$true] %s2722
      %2725 = dma.vmem_to_hbm [thread:$0]  %s2723, 128, %s5, [#allocation3]
    $region25: #{mlp_forward.1} parent=1 // pred_fallthru
      _
    // Predicated region
    $region26: #{mlp_forward.1} parent=1 // pred_check
      _
    $region27: #{mlp_forward.1} parent=1 // pred_check_branch
      %2727 = sbr.rel (0) target = $region29
    $region28: #{mlp_forward.1} parent=1 // pred_region
      %2728 = dma.done [#allocation3], 128
    $region29: #{mlp_forward.1} parent=1 // pred_fallthru
      _
    %2729 = vsyncpa [#allocation3], 1

</llo_original>
